<compile_context>
chip_gen: v7x
topology: tpu7x:2x2x1
jax: 0.10.0
libtpu: 0.0.40
codegen_flags: <defaults>
</compile_context>

<pallas_src>
import functools

import jax
import jax.numpy as jnp
import numpy as np
from jax import lax
from jax.experimental import pallas as pl
from jax.experimental.pallas import tpu as pltpu


def _gatedconv_kernel(x_ref, w_ref, scale_ref, bias_ref, out_ref,
                      *, H, W, C_in, KH, KW, pad):
    """One grid step = (one batch element, one C_out block).

    x_ref     : (1, H, W, C_in)        un-padded NHWC activation tile (compute dtype)
    w_ref     : (KH*KW*C_in, Ct)       im2col-flattened conv weights   (compute dtype)
    scale_ref : (1, 1, Ct)  float32    folded BN scale * gate  (per batch, per channel)
    bias_ref  : (1, 1, Ct)  float32    folded BN bias  * gate  (per batch, per channel)
    out_ref   : (1, H*W, Ct) float32
    """
    x = x_ref[0]                                   # (H, W, C_in), compute dtype
    cdt = x.dtype

    # Zero-pad the halo in registers (no wrapper-side HBM pad pass).
    if pad > 0:
        zr = jnp.zeros((pad, W, C_in), cdt)
        xp = jnp.concatenate([zr, x, zr], axis=0)             # (H+2p, W, C_in)
        zc = jnp.zeros((H + 2 * pad, pad, C_in), cdt)
        xp = jnp.concatenate([zc, xp, zc], axis=1)            # (H+2p, W+2p, C_in)
    else:
        xp = x

    # im2col: build (H*W, KH*KW*C_in) once, then a single deep MXU matmul
    # (K = KH*KW*C_in) instead of KH*KW shallow K=C_in matmuls.
    cols = []
    for kh in range(KH):
        for kw in range(KW):
            cols.append(xp[kh:kh + H, kw:kw + W, :].reshape(H * W, C_in))
    patches = jnp.concatenate(cols, axis=-1)                  # (H*W, KH*KW*C_in)

    acc = jnp.dot(patches, w_ref[...],
                  preferred_element_type=jnp.float32)         # (H*W, Ct) f32

    # Fused epilogue: BN (eval, folded) * gate as one FMA, then ReLU.  f32 vregs.
    scale = scale_ref[0, 0, :]                                # (Ct,)
    bias = bias_ref[0, 0, :]
    y = acc * scale[None, :] + bias[None, :]
    out_ref[0] = jnp.maximum(y, 0.0).astype(out_ref.dtype)


def gated_conv_forward(x_nchw, conv_w_oihw, bn_gamma, bn_beta, bn_mean, bn_var,
                       gate_w, gate_b, *, gated=True, ratio=0.5, padding=1,
                       bn_eps=1e-5, compute_dtype=jnp.bfloat16):
    """x_nchw: (B, C_in, H, W) float32. Returns ((B, C_out, H, W) float32, gates)."""
    B, C_in, H, W = x_nchw.shape
    C_out, _, KH, KW = conv_w_oihw.shape

    if KH % 2 == 0 or KW % 2 == 0 or padding != (KH - 1) // 2 or padding != (KW - 1) // 2:
        raise ValueError(
            "This kernel implements stride-1 'same' convolution only "
            "(padding must equal (kernel_size - 1) // 2).")

    # ---- gate computation (tiny, data-dependent top_k/scatter: plain JAX glue) ----
    if gated:
        subsample = jax.nn.sigmoid(jnp.mean(x_nchw, axis=(2, 3)))        # (B, C_in)
        gates = jax.nn.relu(subsample @ gate_w.T + gate_b)               # (B, C_out)
        if ratio < 1:
            inactive = C_out - int(round(C_out * ratio))
            if inactive > 0:
                _, idx = lax.top_k(-gates, inactive)                     # smallest gates
                rows = jnp.arange(B)[:, None]
                gates = gates.at[rows, idx].set(0.0)
        gates = gates.astype(jnp.float32)
    else:
        gates = jnp.ones((B, C_out), jnp.float32)

    # ---- fold BatchNorm (eval) and the gate into per-(batch, channel) scale/bias ----
    inv_std = 1.0 / jnp.sqrt(bn_var + bn_eps)
    bn_scale = (bn_gamma * inv_std).astype(jnp.float32)                  # (C_out,)
    bn_bias = (bn_beta - bn_mean * bn_gamma * inv_std).astype(jnp.float32)
    eff_scale = (gates * bn_scale[None, :]).reshape(B, 1, C_out)         # (B, 1, C_out)
    eff_bias = (gates * bn_bias[None, :]).reshape(B, 1, C_out)

    # ---- layout prep: NCHW -> NHWC, OIHW -> (KH*KW*C_in, C_out); bf16 for the MXU ----
    x_nhwc = jnp.transpose(x_nchw, (0, 2, 3, 1)).astype(compute_dtype)   # (B, H, W, C_in)
    w2d = jnp.transpose(conv_w_oihw, (2, 3, 1, 0)).reshape(
        KH * KW * C_in, C_out).astype(compute_dtype)                     # (KH*KW*C_in, C_out)

    # C_out tiling: lane-dense 128-wide blocks when possible, otherwise one block.
    if C_out > 128 and C_out % 128 == 0:
        ct = 128
    else:
        ct = C_out
    n_cblk = C_out // ct

    kernel = functools.partial(_gatedconv_kernel,
                               H=H, W=W, C_in=C_in, KH=KH, KW=KW, pad=padding)

    out_flat = pl.pallas_call(
        kernel,
        out_shape=jax.ShapeDtypeStruct((B, H * W, C_out), jnp.float32),
        grid_spec=pltpu.PrefetchScalarGridSpec(
            num_scalar_prefetch=0,
            grid=(B, n_cblk),
            in_specs=[
                pl.BlockSpec((1, H, W, C_in), lambda b, c: (b, 0, 0, 0)),   # activations
                pl.BlockSpec((KH * KW * C_in, ct), lambda b, c: (0, c)),    # conv weights
                pl.BlockSpec((1, 1, ct), lambda b, c: (b, 0, c)),           # eff scale
                pl.BlockSpec((1, 1, ct), lambda b, c: (b, 0, c)),           # eff bias
            ],
            out_specs=pl.BlockSpec((1, H * W, ct), lambda b, c: (b, 0, c)),
        ),
        compiler_params=pltpu.CompilerParams(
            dimension_semantics=("parallel", "parallel")),
    )(x_nhwc, w2d, eff_scale, eff_bias)

    out_nchw = jnp.transpose(out_flat.reshape(B, H, W, C_out), (0, 3, 1, 2))
    return out_nchw, gates


def _reference_forward(x_nchw, conv_w_oihw, bn_gamma, bn_beta, bn_mean, bn_var,
                       gates, *, padding=1, bn_eps=1e-5, compute_dtype=jnp.bfloat16):
    """Pure-JAX reference (lax.conv with the same bf16-cast operands)."""
    y = lax.conv_general_dilated(
        x_nchw.astype(compute_dtype), conv_w_oihw.astype(compute_dtype),
        window_strides=(1, 1),
        padding=[(padding, padding), (padding, padding)],
        dimension_numbers=("NCHW", "OIHW", "NCHW"),
        preferred_element_type=jnp.float32)
    scale = (bn_gamma / jnp.sqrt(bn_var + bn_eps)).reshape(1, -1, 1, 1)
    bias = (bn_beta - bn_mean * bn_gamma / jnp.sqrt(bn_var + bn_eps)).reshape(1, -1, 1, 1)
    y = y * scale + bias
    y = y * gates[:, :, None, None]
    return jax.nn.relu(y)


if __name__ == "__main__":
    B, C_in, C_out, H, W = 2, 4, 8, 16, 16
    KH = KW = 3
    ratio = 0.5

    key = jax.random.PRNGKey(0)
    k_x, k_cw, k_gw, k_g, k_b, k_m, k_v = jax.random.split(key, 7)

    x = jax.random.normal(k_x, (B, C_in, H, W), jnp.float32)

    # Conv2d weight (OIHW), kaiming-style scale, no bias.
    conv_w = jax.random.normal(k_cw, (C_out, C_in, KH, KW), jnp.float32) * \
        jnp.sqrt(2.0 / (C_in * KH * KW))

    # Gate Linear: kaiming_normal_ weight (fan_in = C_in), bias = 1 (as in __init__).
    gate_w = jax.random.normal(k_gw, (C_out, C_in), jnp.float32) * jnp.sqrt(2.0 / C_in)
    gate_b = jnp.ones((C_out,), jnp.float32)

    # BatchNorm2d params / running stats (eval mode), deterministic and nontrivial.
    bn_gamma = 1.0 + 0.1 * jax.random.normal(k_g, (C_out,), jnp.float32)
    bn_beta = 0.1 * jax.random.normal(k_b, (C_out,), jnp.float32)
    bn_mean = 0.1 * jax.random.normal(k_m, (C_out,), jnp.float32)
    bn_var = 1.0 + 0.1 * jax.nn.softplus(jax.random.normal(k_v, (C_out,), jnp.float32))

    out, gates = gated_conv_forward(
        x, conv_w, bn_gamma, bn_beta, bn_mean, bn_var, gate_w, gate_b,
        gated=True, ratio=ratio, padding=1)
    out = jax.block_until_ready(out)

    ref = _reference_forward(x, conv_w, bn_gamma, bn_beta, bn_mean, bn_var, gates, padding=1)
    np.testing.assert_allclose(np.asarray(out), np.asarray(ref), rtol=1e-3, atol=1e-3)

    print("KERNEL_OK")
</pallas_src>

<mosaic_0001>
module attributes {stable_mosaic.version = 11 : i64} {
  func.func @_gatedconv_kernel(%arg0: i32, %arg1: i32, %arg2: memref<1x16x16x4xbf16, #tpu.memory_space<vmem>>, %arg3: memref<36x8xbf16, #tpu.memory_space<vmem>>, %arg4: memref<1x1x8xf32, #tpu.memory_space<vmem>>, %arg5: memref<1x1x8xf32, #tpu.memory_space<vmem>>, %arg6: memref<1x256x8xf32, #tpu.memory_space<vmem>>) attributes {dimension_semantics = [#tpu.dimension_semantics<parallel>, #tpu.dimension_semantics<parallel>], iteration_bounds = array<i64: 2, 1>, scalar_prefetch = 0 : i64, scratch_operands = 0 : i64, tpu.core_type = #tpu.core_type<tc>, window_params = [{transform_indices = @transform_0, window_bounds = array<i64: 1, 16, 16, 4>}, {transform_indices = @transform_1, window_bounds = array<i64: 36, 8>}, {transform_indices = @transform_2, window_bounds = array<i64: 1, 1, 8>}, {transform_indices = @transform_3, window_bounds = array<i64: 1, 1, 8>}, {transform_indices = @transform_4, window_bounds = array<i64: 1, 256, 8>}]} {
    %c0 = arith.constant 0 : index
    %c0_0 = arith.constant 0 : index
    %c0_1 = arith.constant 0 : index
    %c0_2 = arith.constant 0 : index
    %0 = vector.load %arg2[%c0, %c0_0, %c0_1, %c0_2] : memref<1x16x16x4xbf16, #tpu.memory_space<vmem>>, vector<1x16x16x4xbf16>
    %1 = vector.shape_cast %0 : vector<1x16x16x4xbf16> to vector<16x16x4xbf16>
    %cst = arith.constant 0.000000e+00 : bf16
    %2 = vector.broadcast %cst : bf16 to vector<1x16x4xbf16>
    %3 = tpu.concatenate %2, %1, %2 in 0 : vector<1x16x4xbf16>, vector<16x16x4xbf16>, vector<1x16x4xbf16> -> vector<18x16x4xbf16>
    %cst_3 = arith.constant 0.000000e+00 : bf16
    %4 = vector.broadcast %cst_3 : bf16 to vector<18x1x4xbf16>
    %5 = tpu.concatenate %4, %3, %4 in 1 : vector<18x1x4xbf16>, vector<18x16x4xbf16>, vector<18x1x4xbf16> -> vector<18x18x4xbf16>
    %6 = vector.extract_strided_slice %5 {offsets = [0, 0, 0], sizes = [16, 16, 4], strides = [1, 1, 1]} : vector<18x18x4xbf16> to vector<16x16x4xbf16>
    %7 = vector.shape_cast %6 : vector<16x16x4xbf16> to vector<256x4xbf16>
    %8 = vector.extract_strided_slice %5 {offsets = [0, 1, 0], sizes = [16, 16, 4], strides = [1, 1, 1]} : vector<18x18x4xbf16> to vector<16x16x4xbf16>
    %9 = vector.shape_cast %8 : vector<16x16x4xbf16> to vector<256x4xbf16>
    %10 = vector.extract_strided_slice %5 {offsets = [0, 2, 0], sizes = [16, 16, 4], strides = [1, 1, 1]} : vector<18x18x4xbf16> to vector<16x16x4xbf16>
    %11 = vector.shape_cast %10 : vector<16x16x4xbf16> to vector<256x4xbf16>
    %12 = vector.extract_strided_slice %5 {offsets = [1, 0, 0], sizes = [16, 16, 4], strides = [1, 1, 1]} : vector<18x18x4xbf16> to vector<16x16x4xbf16>
    %13 = vector.shape_cast %12 : vector<16x16x4xbf16> to vector<256x4xbf16>
    %14 = vector.extract_strided_slice %5 {offsets = [1, 1, 0], sizes = [16, 16, 4], strides = [1, 1, 1]} : vector<18x18x4xbf16> to vector<16x16x4xbf16>
    %15 = vector.shape_cast %14 : vector<16x16x4xbf16> to vector<256x4xbf16>
    %16 = vector.extract_strided_slice %5 {offsets = [1, 2, 0], sizes = [16, 16, 4], strides = [1, 1, 1]} : vector<18x18x4xbf16> to vector<16x16x4xbf16>
    %17 = vector.shape_cast %16 : vector<16x16x4xbf16> to vector<256x4xbf16>
    %18 = vector.extract_strided_slice %5 {offsets = [2, 0, 0], sizes = [16, 16, 4], strides = [1, 1, 1]} : vector<18x18x4xbf16> to vector<16x16x4xbf16>
    %19 = vector.shape_cast %18 : vector<16x16x4xbf16> to vector<256x4xbf16>
    %20 = vector.extract_strided_slice %5 {offsets = [2, 1, 0], sizes = [16, 16, 4], strides = [1, 1, 1]} : vector<18x18x4xbf16> to vector<16x16x4xbf16>
    %21 = vector.shape_cast %20 : vector<16x16x4xbf16> to vector<256x4xbf16>
    %22 = vector.extract_strided_slice %5 {offsets = [2, 2, 0], sizes = [16, 16, 4], strides = [1, 1, 1]} : vector<18x18x4xbf16> to vector<16x16x4xbf16>
    %23 = vector.shape_cast %22 : vector<16x16x4xbf16> to vector<256x4xbf16>
    %24 = tpu.concatenate %7, %9, %11, %13, %15, %17, %19, %21, %23 in 1 : vector<256x4xbf16>, vector<256x4xbf16>, vector<256x4xbf16>, vector<256x4xbf16>, vector<256x4xbf16>, vector<256x4xbf16>, vector<256x4xbf16>, vector<256x4xbf16>, vector<256x4xbf16> -> vector<256x36xbf16>
    %c0_4 = arith.constant 0 : index
    %c0_5 = arith.constant 0 : index
    %25 = vector.load %arg3[%c0_4, %c0_5] : memref<36x8xbf16, #tpu.memory_space<vmem>>, vector<36x8xbf16>
    %cst_6 = arith.constant dense<0.000000e+00> : vector<256x8xf32>
    %26 = tpu.matmul %24, %25, %cst_6 {dimension_numbers = #tpu.dot_dimension_numbers<[1], [0], [0], [1], [0, 0, 1, 1], [], []>} : vector<256x36xbf16>, vector<36x8xbf16>, vector<256x8xf32> -> vector<256x8xf32>
    %c0_7 = arith.constant 0 : index
    %c0_8 = arith.constant 0 : index
    %c0_9 = arith.constant 0 : index
    %27 = vector.load %arg4[%c0_7, %c0_8, %c0_9] : memref<1x1x8xf32, #tpu.memory_space<vmem>>, vector<1x1x8xf32>
    %28 = vector.shape_cast %27 : vector<1x1x8xf32> to vector<8xf32>
    %c0_10 = arith.constant 0 : index
    %c0_11 = arith.constant 0 : index
    %c0_12 = arith.constant 0 : index
    %29 = vector.load %arg5[%c0_10, %c0_11, %c0_12] : memref<1x1x8xf32, #tpu.memory_space<vmem>>, vector<1x1x8xf32>
    %30 = vector.shape_cast %29 : vector<1x1x8xf32> to vector<8xf32>
    %31 = vector.shape_cast %28 : vector<8xf32> to vector<1x8xf32>
    %32 = vector.broadcast %31 : vector<1x8xf32> to vector<256x8xf32>
    %33 = arith.mulf %26, %32 : vector<256x8xf32>
    %34 = vector.shape_cast %30 : vector<8xf32> to vector<1x8xf32>
    %35 = vector.broadcast %34 : vector<1x8xf32> to vector<256x8xf32>
    %36 = arith.addf %33, %35 : vector<256x8xf32>
    %cst_13 = arith.constant 0.000000e+00 : f32
    %37 = vector.broadcast %cst_13 : f32 to vector<256x8xf32>
    %38 = arith.maximumf %36, %37 : vector<256x8xf32>
    %c0_14 = arith.constant 0 : index
    %c0_15 = arith.constant 0 : index
    %c0_16 = arith.constant 0 : index
    %39 = vector.load %arg6[%c0_14, %c0_15, %c0_16] : memref<1x256x8xf32, #tpu.memory_space<vmem>>, vector<1x256x8xf32>
    %40 = vector.shape_cast %39 : vector<1x256x8xf32> to vector<256x8xf32>
    %41 = vector.shape_cast %38 : vector<256x8xf32> to vector<1x256x8xf32>
    tpu.vector_store %arg6[%c0_14, %c0_15, %c0_16], %41 {strides = array<i32>} : memref<1x256x8xf32, #tpu.memory_space<vmem>>, vector<1x256x8xf32>,
    return
  }
  func.func @transform_0(%arg0: i32, %arg1: i32) -> (i32, i32, i32, i32) {
    %c0_i32 = arith.constant 0 : i32
    %c0_i32_0 = arith.constant 0 : i32
    %c0_i32_1 = arith.constant 0 : i32
    %c0_i32_2 = arith.constant 0 : i32
    return %arg0, %c0_i32, %c0_i32_0, %c0_i32_1 : i32, i32, i32, i32
  }
  func.func @transform_1(%arg0: i32, %arg1: i32) -> (i32, i32) {
    %c0_i32 = arith.constant 0 : i32
    %c0_i32_0 = arith.constant 0 : i32
    return %c0_i32, %arg1 : i32, i32
  }
  func.func @transform_2(%arg0: i32, %arg1: i32) -> (i32, i32, i32) {
    %c0_i32 = arith.constant 0 : i32
    %c0_i32_0 = arith.constant 0 : i32
    return %arg0, %c0_i32, %arg1 : i32, i32, i32
  }
  func.func @transform_3(%arg0: i32, %arg1: i32) -> (i32, i32, i32) {
    %c0_i32 = arith.constant 0 : i32
    %c0_i32_0 = arith.constant 0 : i32
    return %arg0, %c0_i32, %arg1 : i32, i32, i32
  }
  func.func @transform_4(%arg0: i32, %arg1: i32) -> (i32, i32, i32) {
    %c0_i32 = arith.constant 0 : i32
    %c0_i32_0 = arith.constant 0 : i32
    return %arg0, %c0_i32, %arg1 : i32, i32, i32
  }
}

</mosaic_0001>

<llo_original>
// kernel: tpu_custom_call.1
$region0: #{tpu_custom_call.1}
  #allocation0 [shape = 'u32[]', space=smem, size = 0x4, offset = 0x4, fixed_abs, tag = 'smem constant byte address 0x4 - core index']
  #allocation1 [shape = 'u32[144,128]{1,0:T(1,128)}', space=vmem, size = 0x12000, scoped, tag = 'internal scratch']
  %s0 = inlined_call_operand.vmem [shape: bf16[2,16,16,4], index: 0, kind: input, shape index: {}]
  %s1 = inlined_call_operand.vmem [shape: bf16[36,8], index: 1, kind: input, shape index: {}]
  %s2 = inlined_call_operand.vmem [shape: f32[2,1,8], index: 2, kind: input, shape index: {}]
  %s3 = inlined_call_operand.vmem [shape: f32[2,1,8], index: 3, kind: input, shape index: {}]
  %s4 = inlined_call_operand.vmem [shape: f32[2,256,8], index: 4, kind: output, shape index: {}]
  %s5 = sld [smem:[#allocation0]]
  $region49: #{tpu_custom_call.1} parent=0
    _
  %s7 = ssub.s32 1, %s5
  %s8 = scalar_select 0, %s7, %s5
  loop: start=0, step=1, limit=4
  $region2: #{tpu_custom_call.1} parent=0 // loop_pre_header
    _
  $region3: #{tpu_custom_call.1} parent=0 // loop_header
    %s10 = sphi 0, %s14
    %p11 = scmp.ge.s32.totalorder %s10, 4
    %s17 = sphi 0, %s29
    %s18 = sphi 0, %s25
    %s19 = sphi 0, %s17
    %s20 = sphi 0, %s18
    %s21 = sphi 0, %s19
    %s22 = sphi 0, %s20
    %s32 = sphi 0, %s34
    %s35 = sphi 0, %s32
    %s36 = sphi 0, %s35
    %s52 = sphi 0, %s36
    %s58 = sphi 0, %s60
    %s61 = sphi 0, %s58
    %s62 = sphi 0, %s61
    %s78 = sphi 0, %s62
    %s86 = sphi 0, %s88
    %s89 = sphi 0, %s86
    %s90 = sphi 0, %s89
    %s106 = sphi 0, %s90
    %s114 = sphi 0, %s116
    %s117 = sphi 0, %s114
    %s118 = sphi 0, %s117
    %s134 = sphi 0, %s118
    %s142 = sphi 0, %s144
    %s145 = sphi 0, %s142
    %s146 = sphi 0, %s145
    %s162 = sphi 0, %s146
  $region4: #{tpu_custom_call.1} parent=0 // loop_header_branch
    %13 = sbr.rel (%p11) target = $region8
  $region5: #{tpu_custom_call.1} parent=0 // loop_body
    %s15 = ssub.s32 %s10, 1
    %s16 = ssub.s32 %s10, 2
    %s23 = sadd.s32 1, %s18
    %p24 = scmp.ge.s32.totalorder %s23, 1
    %s25 = scalar_select %p24, 0, %s23
    %s26 = sadd.s32 1, %s17
    %s27 = scalar_select %p24, %s26, %s17
    %p28 = scmp.ge.s32.totalorder %s27, 2
    %s29 = scalar_select %p28, 0, %s27
    %s30 = ssub.s32 %s17, %s29
    %p31 = scmp.eq.s32.totalorder %s30, 0
    %s33 = sadd.s32 %s32, 1
    %s34 = scalar_select %p31, %s32, %s33
    %p37 = pneg %p31
    %p38 = scmp.eq.s32.totalorder %s10, 1
    %p39 = por %p37, %p38
    %p40 = scmp.ne.s32.totalorder %s32, %s35
    %p41 = scmp.eq.s32.totalorder %s10, 0
    %p42 = por %p40, %p41
    %p43 = scmp.ne.s32.totalorder %s32, %s35
    %p44 = scmp.eq.s32.totalorder %s15, 1
    %p45 = por %p43, %p44
    %p46 = scmp.ne.s32.totalorder %s35, %s36
    %p47 = scmp.eq.s32.totalorder %s15, 0
    %p48 = por %p46, %p47
    %p49 = scmp.ne.s32.totalorder %s35, %s36
    %p50 = scmp.eq.s32.totalorder %s16, 1
    %p51 = por %p49, %p50
    %p53 = scmp.ne.s32.totalorder %s36, %s52
    %p54 = scmp.eq.s32.totalorder %s16, 0
    %p55 = por %p53, %p54
    %s56 = ssub.s32 %s18, %s25
    %p57 = scmp.eq.s32.totalorder %s56, 0
    %s59 = sadd.s32 %s58, 1
    %s60 = scalar_select %p57, %s58, %s59
    %p63 = pneg %p57
    %p64 = scmp.eq.s32.totalorder %s10, 1
    %p65 = por %p63, %p64
    %p66 = scmp.ne.s32.totalorder %s58, %s61
    %p67 = scmp.eq.s32.totalorder %s10, 0
    %p68 = por %p66, %p67
    %p69 = scmp.ne.s32.totalorder %s58, %s61
    %p70 = scmp.eq.s32.totalorder %s15, 1
    %p71 = por %p69, %p70
    %p72 = scmp.ne.s32.totalorder %s61, %s62
    %p73 = scmp.eq.s32.totalorder %s15, 0
    %p74 = por %p72, %p73
    %p75 = scmp.ne.s32.totalorder %s61, %s62
    %p76 = scmp.eq.s32.totalorder %s16, 1
    %p77 = por %p75, %p76
    %p79 = scmp.ne.s32.totalorder %s62, %s78
    %p80 = scmp.eq.s32.totalorder %s16, 0
    %p81 = por %p79, %p80
    %s82 = ssub.s32 %s17, %s29
    %s83 = ssub.s32 %s18, %s25
    %s84 = sor.u32 %s82, %s83
    %p85 = scmp.eq.s32.totalorder %s84, 0
    %s87 = sadd.s32 %s86, 1
    %s88 = scalar_select %p85, %s86, %s87
    %p91 = pneg %p85
    %p92 = scmp.eq.s32.totalorder %s10, 1
    %p93 = por %p91, %p92
    %p94 = scmp.ne.s32.totalorder %s86, %s89
    %p95 = scmp.eq.s32.totalorder %s10, 0
    %p96 = por %p94, %p95
    %p97 = scmp.ne.s32.totalorder %s86, %s89
    %p98 = scmp.eq.s32.totalorder %s15, 1
    %p99 = por %p97, %p98
    %p100 = scmp.ne.s32.totalorder %s89, %s90
    %p101 = scmp.eq.s32.totalorder %s15, 0
    %p102 = por %p100, %p101
    %p103 = scmp.ne.s32.totalorder %s89, %s90
    %p104 = scmp.eq.s32.totalorder %s16, 1
    %p105 = por %p103, %p104
    %p107 = scmp.ne.s32.totalorder %s90, %s106
    %p108 = scmp.eq.s32.totalorder %s16, 0
    %p109 = por %p107, %p108
    %s110 = ssub.s32 %s17, %s29
    %s111 = ssub.s32 %s18, %s25
    %s112 = sor.u32 %s110, %s111
    %p113 = scmp.eq.s32.totalorder %s112, 0
    %s115 = sadd.s32 %s114, 1
    %s116 = scalar_select %p113, %s114, %s115
    %p119 = pneg %p113
    %p120 = scmp.eq.s32.totalorder %s10, 1
    %p121 = por %p119, %p120
    %p122 = scmp.ne.s32.totalorder %s114, %s117
    %p123 = scmp.eq.s32.totalorder %s10, 0
    %p124 = por %p122, %p123
    %p125 = scmp.ne.s32.totalorder %s114, %s117
    %p126 = scmp.eq.s32.totalorder %s15, 1
    %p127 = por %p125, %p126
    %p128 = scmp.ne.s32.totalorder %s117, %s118
    %p129 = scmp.eq.s32.totalorder %s15, 0
    %p130 = por %p128, %p129
    %p131 = scmp.ne.s32.totalorder %s117, %s118
    %p132 = scmp.eq.s32.totalorder %s16, 1
    %p133 = por %p131, %p132
    %p135 = scmp.ne.s32.totalorder %s118, %s134
    %p136 = scmp.eq.s32.totalorder %s16, 0
    %p137 = por %p135, %p136
    %s138 = ssub.s32 %s17, %s29
    %s139 = ssub.s32 %s18, %s25
    %s140 = sor.u32 %s138, %s139
    %p141 = scmp.eq.s32.totalorder %s140, 0
    %s143 = sadd.s32 %s142, 1
    %s144 = scalar_select %p141, %s142, %s143
    %p147 = pneg %p141
    %p148 = scmp.eq.s32.totalorder %s10, 1
    %p149 = por %p147, %p148
    %p150 = scmp.ne.s32.totalorder %s142, %s145
    %p151 = scmp.eq.s32.totalorder %s10, 0
    %p152 = por %p150, %p151
    %p153 = scmp.ne.s32.totalorder %s142, %s145
    %p154 = scmp.eq.s32.totalorder %s15, 1
    %p155 = por %p153, %p154
    %p156 = scmp.ne.s32.totalorder %s145, %s146
    %p157 = scmp.eq.s32.totalorder %s15, 0
    %p158 = por %p156, %p157
    %p159 = scmp.ne.s32.totalorder %s145, %s146
    %p160 = scmp.eq.s32.totalorder %s16, 1
    %p161 = por %p159, %p160
    %p163 = scmp.ne.s32.totalorder %s146, %s162
    %p164 = scmp.eq.s32.totalorder %s16, 0
    %p165 = por %p163, %p164
    %p166 = scmp.le.s32.totalorder 1, %s10
    %p167 = scmp.lt.s32.totalorder %s10, 3
    %p168 = pnand %p166, %p167
    %p169 = pneg %p168
    // Predicated region
    $region9: #{tpu_custom_call.1} parent=5 // pred_check
      _
    $region10: #{tpu_custom_call.1} parent=5 // pred_check_branch
      %171 = sbr.rel (%p168) target = $region12
    $region11: #{tpu_custom_call.1} parent=5 // pred_region
      %s172 = ssub.s32 %s10, 1
      // Predicated region
      $region13: #{tpu_custom_call.1} parent=11 // pred_check
        %p173 = pneg %p74
      $region14: #{tpu_custom_call.1} parent=11 // pred_check_branch
        %175 = sbr.rel (%p173) target = $region16
      $region15: #{tpu_custom_call.1} parent=11 // pred_region
        %p176 = scmp.lt.s32.totalorder %s20, 0
        %s177 = scalar_select %p176, %s20, 0
        %s178 = smul.addr %s177, 4
        %s179 = scalar_lea.vmem %s1, %s178
      $region16: #{tpu_custom_call.1} parent=11 // pred_fallthru
        _
    $region12: #{tpu_custom_call.1} parent=5 // pred_fallthru
      _
    %p180 = scmp.lt.s32.totalorder %s10, 2
    // Predicated region
    $region17: #{tpu_custom_call.1} parent=5 // pred_check
      %p181 = pneg %p180
    $region18: #{tpu_custom_call.1} parent=5 // pred_check_branch
      %183 = sbr.rel (%p181) target = $region20
    $region19: #{tpu_custom_call.1} parent=5 // pred_region
      // Predicated region
      $region21: #{tpu_custom_call.1} parent=19 // pred_check
        %p184 = pneg %p42
      $region22: #{tpu_custom_call.1} parent=19 // pred_check_branch
        %186 = sbr.rel (%p184) target = $region24
      $region23: #{tpu_custom_call.1} parent=19 // pred_region
        %p187 = scmp.lt.s32.totalorder %s17, 1
        %s188 = scalar_select %p187, %s17, 1
        %s189 = smul.addr %s188, 32
        %s190 = smul.addr %s189, 4
        %s191 = scalar_lea.vmem %s0, %s190
      $region24: #{tpu_custom_call.1} parent=19 // pred_fallthru
        _
      // Predicated region
      $region25: #{tpu_custom_call.1} parent=19 // pred_check
        %p192 = pneg %p96
      $region26: #{tpu_custom_call.1} parent=19 // pred_check_branch
        %194 = sbr.rel (%p192) target = $region28
      $region27: #{tpu_custom_call.1} parent=19 // pred_region
        %p195 = scmp.lt.s32.totalorder %s17, 1
        %s196 = scalar_select %p195, %s17, 1
        %p197 = scmp.lt.s32.totalorder %s18, 0
        %s198 = scalar_select %p197, %s18, 0
        %s199 = sadd.s32 %s198, %s196
        %s200 = scalar_lea.vmem %s2, %s199
      $region28: #{tpu_custom_call.1} parent=19 // pred_fallthru
        _
      // Predicated region
      $region29: #{tpu_custom_call.1} parent=19 // pred_check
        %p201 = pneg %p124
      $region30: #{tpu_custom_call.1} parent=19 // pred_check_branch
        %203 = sbr.rel (%p201) target = $region32
      $region31: #{tpu_custom_call.1} parent=19 // pred_region
        %p204 = scmp.lt.s32.totalorder %s17, 1
        %s205 = scalar_select %p204, %s17, 1
        %p206 = scmp.lt.s32.totalorder %s18, 0
        %s207 = scalar_select %p206, %s18, 0
        %s208 = sadd.s32 %s207, %s205
        %s209 = scalar_lea.vmem %s3, %s208
      $region32: #{tpu_custom_call.1} parent=19 // pred_fallthru
        _
    $region20: #{tpu_custom_call.1} parent=5 // pred_fallthru
      _
    %p210 = scmp.le.s32.totalorder 1, %s10
    %p211 = scmp.lt.s32.totalorder %s10, 3
    %p212 = pnand %p210, %p211
    %p213 = pneg %p212
    // Predicated region
    $region33: #{tpu_custom_call.1} parent=5 // pred_check
      _
    $region34: #{tpu_custom_call.1} parent=5 // pred_check_branch
      %215 = sbr.rel (%p212) target = $region36
    $region35: #{tpu_custom_call.1} parent=5 // pred_region
      %s216 = ssub.s32 %s10, 1
      %p217 = scmp.lt.s32.totalorder %s19, 1
      %s218 = scalar_select %p217, %s19, 1
      %s219 = smul.addr %s218, 32
      %s220 = smul.addr %s219, 4
      %s221 = scalar_lea.vmem %s0, %s220
      %p222 = pneg %p48
      %p223 = pneg %p45
      %p224 = scmp.lt.s32.totalorder %s20, 0
      %s225 = scalar_select %p224, %s20, 0
      %s226 = smul.addr %s225, 4
      %s227 = scalar_lea.vmem %s1, %s226
      %p228 = pneg %p74
      %p229 = pneg %p71
      %p230 = scmp.lt.s32.totalorder %s19, 1
      %s231 = scalar_select %p230, %s19, 1
      %p232 = scmp.lt.s32.totalorder %s20, 0
      %s233 = scalar_select %p232, %s20, 0
      %s234 = sadd.s32 %s233, %s231
      %s235 = scalar_lea.vmem %s2, %s234
      %p236 = pneg %p102
      %p237 = pneg %p99
      %p238 = scmp.lt.s32.totalorder %s19, 1
      %s239 = scalar_select %p238, %s19, 1
      %p240 = scmp.lt.s32.totalorder %s20, 0
      %s241 = scalar_select %p240, %s20, 0
      %s242 = sadd.s32 %s241, %s239
      %s243 = scalar_lea.vmem %s3, %s242
      %p244 = pneg %p130
      %p245 = pneg %p127
      %p246 = pneg %p158
      %p247 = pneg %p155
      %p248 = scmp.lt.s32.totalorder %s19, 1
      %s249 = scalar_select %p248, %s19, 1
      %p250 = scmp.lt.s32.totalorder %s20, 0
      %s251 = scalar_select %p250, %s20, 0
      %s252 = smul.addr %s249, 32
      %s253 = sadd.s32 %s251, %s252
      %s254 = smul.addr %s253, 8
      %s255 = scalar_lea.vmem %s4, %s254
      %p256 = scmp.lt.s32.totalorder %s19, 1
      %s257 = scalar_select %p256, %s19, 1
      %s258 = smul.addr %s257, 32
      %s259 = smul.addr %s258, 4
      %s260 = scalar_lea.vmem %s0, %s259
      %p261 = scmp.lt.s32.totalorder %s20, 0
      %s262 = scalar_select %p261, %s20, 0
      %s263 = smul.addr %s262, 4
      %s264 = scalar_lea.vmem %s1, %s263
      %p265 = scmp.lt.s32.totalorder %s19, 1
      %s266 = scalar_select %p265, %s19, 1
      %p267 = scmp.lt.s32.totalorder %s20, 0
      %s268 = scalar_select %p267, %s20, 0
      %s269 = sadd.s32 %s268, %s266
      %s270 = scalar_lea.vmem %s2, %s269
      %p271 = scmp.lt.s32.totalorder %s19, 1
      %s272 = scalar_select %p271, %s19, 1
      %p273 = scmp.lt.s32.totalorder %s20, 0
      %s274 = scalar_select %p273, %s20, 0
      %s275 = sadd.s32 %s274, %s272
      %s276 = scalar_lea.vmem %s3, %s275
      %p277 = scmp.lt.s32.totalorder %s19, 1
      %s278 = scalar_select %p277, %s19, 1
      %p279 = scmp.lt.s32.totalorder %s20, 0
      %s280 = scalar_select %p279, %s20, 0
      %s281 = smul.addr %s278, 32
      %s282 = sadd.s32 %s280, %s281
      %s283 = smul.addr %s282, 8
      %s284 = scalar_lea.vmem %s4, %s283
      %v286 = vld [vmem:[%s260] sm:$0xf]
      %v287 = vld [vmem:[%s260 + $0x4] sm:$0xf]
      %v288 = vld [vmem:[%s260 + $0x8] sm:$0xf]
      %v289 = vld [vmem:[%s260 + $0xc] sm:$0xf]
      %v290 = vld [vmem:[%s260 + $0x10] sm:$0xf]
      %v291 = vld [vmem:[%s260 + $0x14] sm:$0xf]
      %v292 = vld [vmem:[%s260 + $0x18] sm:$0xf]
      %v293 = vld [vmem:[%s260 + $0x1c] sm:$0xf]
      %v294 = vld [vmem:[%s260 + $0x20] sm:$0xf]
      %v295 = vld [vmem:[%s260 + $0x24] sm:$0xf]
      %v296 = vld [vmem:[%s260 + $0x28] sm:$0xf]
      %v297 = vld [vmem:[%s260 + $0x2c] sm:$0xf]
      %v298 = vld [vmem:[%s260 + $0x30] sm:$0xf]
      %v299 = vld [vmem:[%s260 + $0x34] sm:$0xf]
      %v300 = vld [vmem:[%s260 + $0x38] sm:$0xf]
      %v301 = vld [vmem:[%s260 + $0x3c] sm:$0xf]
      %v302 = vld [vmem:[%s260 + $0x40] sm:$0xf]
      %v303 = vld [vmem:[%s260 + $0x44] sm:$0xf]
      %v304 = vld [vmem:[%s260 + $0x48] sm:$0xf]
      %v305 = vld [vmem:[%s260 + $0x4c] sm:$0xf]
      %v306 = vld [vmem:[%s260 + $0x50] sm:$0xf]
      %v307 = vld [vmem:[%s260 + $0x54] sm:$0xf]
      %v308 = vld [vmem:[%s260 + $0x58] sm:$0xf]
      %v309 = vld [vmem:[%s260 + $0x5c] sm:$0xf]
      %v310 = vld [vmem:[%s260 + $0x60] sm:$0xf]
      %v311 = vld [vmem:[%s260 + $0x64] sm:$0xf]
      %v312 = vld [vmem:[%s260 + $0x68] sm:$0xf]
      %v313 = vld [vmem:[%s260 + $0x6c] sm:$0xf]
      %v314 = vld [vmem:[%s260 + $0x70] sm:$0xf]
      %v315 = vld [vmem:[%s260 + $0x74] sm:$0xf]
      %v316 = vld [vmem:[%s260 + $0x78] sm:$0xf]
      %v317 = vld [vmem:[%s260 + $0x7c] sm:$0xf]
      %v350 = vunpack.c.l.b16 %v286
      %v351 = vunpack.c.l.b16 %v287
      %v352 = vunpack.c.l.b16 %v288
      %v353 = vunpack.c.l.b16 %v289
      %v354 = vunpack.c.l.b16 %v290
      %v355 = vunpack.c.l.b16 %v291
      %v356 = vunpack.c.l.b16 %v292
      %v357 = vunpack.c.l.b16 %v293
      %v358 = vunpack.c.l.b16 %v294
      %v359 = vunpack.c.l.b16 %v295
      %v360 = vunpack.c.l.b16 %v296
      %v361 = vunpack.c.l.b16 %v297
      %v362 = vunpack.c.l.b16 %v298
      %v363 = vunpack.c.l.b16 %v299
      %v364 = vunpack.c.l.b16 %v300
      %v365 = vunpack.c.l.b16 %v301
      %v366 = vunpack.c.l.b16 %v302
      %v367 = vunpack.c.l.b16 %v303
      %v368 = vunpack.c.l.b16 %v304
      %v369 = vunpack.c.l.b16 %v305
      %v370 = vunpack.c.l.b16 %v306
      %v371 = vunpack.c.l.b16 %v307
      %v372 = vunpack.c.l.b16 %v308
      %v373 = vunpack.c.l.b16 %v309
      %v374 = vunpack.c.l.b16 %v310
      %v375 = vunpack.c.l.b16 %v311
      %v376 = vunpack.c.l.b16 %v312
      %v377 = vunpack.c.l.b16 %v313
      %v378 = vunpack.c.l.b16 %v314
      %v379 = vunpack.c.l.b16 %v315
      %v380 = vunpack.c.l.b16 %v316
      %v381 = vunpack.c.l.b16 %v317
      %v382 = vpack.c.b16 %v351, %v350
      %v383 = vpack.c.b16 %v353, %v352
      %v384 = vpack.c.b16 %v355, %v354
      %v385 = vpack.c.b16 %v357, %v356
      %v386 = vpack.c.b16 %v359, %v358
      %v387 = vpack.c.b16 %v361, %v360
      %v388 = vpack.c.b16 %v363, %v362
      %v389 = vpack.c.b16 %v365, %v364
      %v390 = vpack.c.b16 %v367, %v366
      %v391 = vpack.c.b16 %v369, %v368
      %v392 = vpack.c.b16 %v371, %v370
      %v393 = vpack.c.b16 %v373, %v372
      %v394 = vpack.c.b16 %v375, %v374
      %v395 = vpack.c.b16 %v377, %v376
      %v396 = vpack.c.b16 %v379, %v378
      %v397 = vpack.c.b16 %v381, %v380
      %v399 = vshrl.u32 0, 16
      %v401 = vrot.slane %v399, 7
      %v402 = vshll.u32 0, 16
      %v404 = vor.u32 %v401, %v402
      %v406 = vshrl.u32 %v382, 16
      %v408 = vrot.slane %v406, 7
      %v409 = vshll.u32 %v382, 16
      %v411 = vor.u32 %v408, %v409
      %v413 = vshrl.u32 %v383, 16
      %v415 = vrot.slane %v413, 7
      %v416 = vshll.u32 %v383, 16
      %v418 = vor.u32 %v415, %v416
      %v420 = vshrl.u32 %v384, 16
      %v422 = vrot.slane %v420, 7
      %v423 = vshll.u32 %v384, 16
      %v425 = vor.u32 %v422, %v423
      %v427 = vshrl.u32 %v385, 16
      %v429 = vrot.slane %v427, 7
      %v430 = vshll.u32 %v385, 16
      %v432 = vor.u32 %v429, %v430
      %v434 = vshrl.u32 %v386, 16
      %v436 = vrot.slane %v434, 7
      %v437 = vshll.u32 %v386, 16
      %v439 = vor.u32 %v436, %v437
      %v441 = vshrl.u32 %v387, 16
      %v443 = vrot.slane %v441, 7
      %v444 = vshll.u32 %v387, 16
      %v446 = vor.u32 %v443, %v444
      %v448 = vshrl.u32 %v388, 16
      %v450 = vrot.slane %v448, 7
      %v451 = vshll.u32 %v388, 16
      %v453 = vor.u32 %v450, %v451
      %v455 = vshrl.u32 %v389, 16
      %v457 = vrot.slane %v455, 7
      %v458 = vshll.u32 %v389, 16
      %v460 = vor.u32 %v457, %v458
      %v462 = vshrl.u32 %v390, 16
      %v464 = vrot.slane %v462, 7
      %v465 = vshll.u32 %v390, 16
      %v467 = vor.u32 %v464, %v465
      %v469 = vshrl.u32 %v391, 16
      %v471 = vrot.slane %v469, 7
      %v472 = vshll.u32 %v391, 16
      %v474 = vor.u32 %v471, %v472
      %v476 = vshrl.u32 %v392, 16
      %v478 = vrot.slane %v476, 7
      %v479 = vshll.u32 %v392, 16
      %v481 = vor.u32 %v478, %v479
      %v483 = vshrl.u32 %v393, 16
      %v485 = vrot.slane %v483, 7
      %v486 = vshll.u32 %v393, 16
      %v488 = vor.u32 %v485, %v486
      %v490 = vshrl.u32 %v394, 16
      %v492 = vrot.slane %v490, 7
      %v493 = vshll.u32 %v394, 16
      %v495 = vor.u32 %v492, %v493
      %v497 = vshrl.u32 %v395, 16
      %v499 = vrot.slane %v497, 7
      %v500 = vshll.u32 %v395, 16
      %v502 = vor.u32 %v499, %v500
      %v504 = vshrl.u32 %v396, 16
      %v506 = vrot.slane %v504, 7
      %v507 = vshll.u32 %v396, 16
      %v509 = vor.u32 %v506, %v507
      %v511 = vshrl.u32 %v397, 16
      %v513 = vrot.slane %v511, 7
      %v514 = vshll.u32 %v397, 16
      %v516 = vor.u32 %v513, %v514
      %vm551 = vcmask 1040384
      %vm552 = vsmask.f32 256
      %vm553 = vmand %vm551, %vm552
      %v554 = vsel %vm553, 0, %v404
      %v555 = vsel %vm553, 0, %v411
      %v556 = vsel %vm553, 0, %v418
      %v557 = vsel %vm553, 0, %v425
      %v558 = vsel %vm553, 0, %v432
      %v559 = vsel %vm553, 0, %v439
      %v560 = vsel %vm553, 0, %v446
      %v561 = vsel %vm553, 0, %v453
      %v562 = vsel %vm553, 0, %v460
      %v563 = vsel %vm553, 0, %v467
      %v564 = vsel %vm553, 0, %v474
      %v565 = vsel %vm553, 0, %v481
      %v566 = vsel %vm553, 0, %v488
      %v567 = vsel %vm553, 0, %v495
      %v568 = vsel %vm553, 0, %v502
      %v569 = vsel %vm553, 0, %v509
      %v570 = vsel %vm553, 0, %v516
      %v571 = vsel %vm553, %v401, 0
      %v572 = vsel %vm553, %v408, 0
      %v573 = vsel %vm553, %v415, 0
      %v574 = vsel %vm553, %v422, 0
      %v575 = vsel %vm553, %v429, 0
      %v576 = vsel %vm553, %v436, 0
      %v577 = vsel %vm553, %v443, 0
      %v578 = vsel %vm553, %v450, 0
      %v579 = vsel %vm553, %v457, 0
      %v580 = vsel %vm553, %v464, 0
      %v581 = vsel %vm553, %v471, 0
      %v582 = vsel %vm553, %v478, 0
      %v583 = vsel %vm553, %v485, 0
      %v584 = vsel %vm553, %v492, 0
      %v585 = vsel %vm553, %v499, 0
      %v586 = vsel %vm553, %v506, 0
      %v587 = vsel %vm553, %v513, 0
      %vm588 = vsmask.f32 7424
      %v590 = vshrl.u32 %v554, 16
      %v592 = vshll.u32 %v554, 16
      %v594 = vrot.slane %v592, 1
      %v595 = vor.u32 %v590, %v594
      %v597 = vshll.u32 %v571, 16
      %v599 = vrot.slane %v597, 1
      %v600 = vsel %vm588, %v595, %v599
      %v602 = vshrl.u32 %v555, 16
      %v604 = vshll.u32 %v555, 16
      %v606 = vrot.slane %v604, 1
      %v607 = vor.u32 %v602, %v606
      %v609 = vshll.u32 %v572, 16
      %v611 = vrot.slane %v609, 1
      %v612 = vsel %vm588, %v607, %v611
      %v614 = vshrl.u32 %v556, 16
      %v616 = vshll.u32 %v556, 16
      %v618 = vrot.slane %v616, 1
      %v619 = vor.u32 %v614, %v618
      %v621 = vshll.u32 %v573, 16
      %v623 = vrot.slane %v621, 1
      %v624 = vsel %vm588, %v619, %v623
      %v626 = vshrl.u32 %v557, 16
      %v628 = vshll.u32 %v557, 16
      %v630 = vrot.slane %v628, 1
      %v631 = vor.u32 %v626, %v630
      %v633 = vshll.u32 %v574, 16
      %v635 = vrot.slane %v633, 1
      %v636 = vsel %vm588, %v631, %v635
      %v638 = vshrl.u32 %v558, 16
      %v640 = vshll.u32 %v558, 16
      %v642 = vrot.slane %v640, 1
      %v643 = vor.u32 %v638, %v642
      %v645 = vshll.u32 %v575, 16
      %v647 = vrot.slane %v645, 1
      %v648 = vsel %vm588, %v643, %v647
      %v650 = vshrl.u32 %v559, 16
      %v652 = vshll.u32 %v559, 16
      %v654 = vrot.slane %v652, 1
      %v655 = vor.u32 %v650, %v654
      %v657 = vshll.u32 %v576, 16
      %v659 = vrot.slane %v657, 1
      %v660 = vsel %vm588, %v655, %v659
      %v662 = vshrl.u32 %v560, 16
      %v664 = vshll.u32 %v560, 16
      %v666 = vrot.slane %v664, 1
      %v667 = vor.u32 %v662, %v666
      %v669 = vshll.u32 %v577, 16
      %v671 = vrot.slane %v669, 1
      %v672 = vsel %vm588, %v667, %v671
      %v674 = vshrl.u32 %v561, 16
      %v676 = vshll.u32 %v561, 16
      %v678 = vrot.slane %v676, 1
      %v679 = vor.u32 %v674, %v678
      %v681 = vshll.u32 %v578, 16
      %v683 = vrot.slane %v681, 1
      %v684 = vsel %vm588, %v679, %v683
      %v686 = vshrl.u32 %v562, 16
      %v688 = vshll.u32 %v562, 16
      %v690 = vrot.slane %v688, 1
      %v691 = vor.u32 %v686, %v690
      %v693 = vshll.u32 %v579, 16
      %v695 = vrot.slane %v693, 1
      %v696 = vsel %vm588, %v691, %v695
      %v698 = vshrl.u32 %v563, 16
      %v700 = vshll.u32 %v563, 16
      %v702 = vrot.slane %v700, 1
      %v703 = vor.u32 %v698, %v702
      %v705 = vshll.u32 %v580, 16
      %v707 = vrot.slane %v705, 1
      %v708 = vsel %vm588, %v703, %v707
      %v710 = vshrl.u32 %v564, 16
      %v712 = vshll.u32 %v564, 16
      %v714 = vrot.slane %v712, 1
      %v715 = vor.u32 %v710, %v714
      %v717 = vshll.u32 %v581, 16
      %v719 = vrot.slane %v717, 1
      %v720 = vsel %vm588, %v715, %v719
      %v722 = vshrl.u32 %v565, 16
      %v724 = vshll.u32 %v565, 16
      %v726 = vrot.slane %v724, 1
      %v727 = vor.u32 %v722, %v726
      %v729 = vshll.u32 %v582, 16
      %v731 = vrot.slane %v729, 1
      %v732 = vsel %vm588, %v727, %v731
      %v734 = vshrl.u32 %v566, 16
      %v736 = vshll.u32 %v566, 16
      %v738 = vrot.slane %v736, 1
      %v739 = vor.u32 %v734, %v738
      %v741 = vshll.u32 %v583, 16
      %v743 = vrot.slane %v741, 1
      %v744 = vsel %vm588, %v739, %v743
      %v746 = vshrl.u32 %v567, 16
      %v748 = vshll.u32 %v567, 16
      %v750 = vrot.slane %v748, 1
      %v751 = vor.u32 %v746, %v750
      %v753 = vshll.u32 %v584, 16
      %v755 = vrot.slane %v753, 1
      %v756 = vsel %vm588, %v751, %v755
      %v758 = vshrl.u32 %v568, 16
      %v760 = vshll.u32 %v568, 16
      %v762 = vrot.slane %v760, 1
      %v763 = vor.u32 %v758, %v762
      %v765 = vshll.u32 %v585, 16
      %v767 = vrot.slane %v765, 1
      %v768 = vsel %vm588, %v763, %v767
      %v770 = vshrl.u32 %v569, 16
      %v772 = vshll.u32 %v569, 16
      %v774 = vrot.slane %v772, 1
      %v775 = vor.u32 %v770, %v774
      %v777 = vshll.u32 %v586, 16
      %v779 = vrot.slane %v777, 1
      %v780 = vsel %vm588, %v775, %v779
      %vm813 = vcmask 1046528
      %v814 = vrot.slane %v554, 1
      %v815 = vrot.slane %v571, 1
      %v816 = vsel %vm813, %v814, %v815
      %v817 = vrot.slane %v555, 1
      %v818 = vrot.slane %v572, 1
      %v819 = vsel %vm813, %v817, %v818
      %v820 = vrot.slane %v556, 1
      %v821 = vrot.slane %v573, 1
      %v822 = vsel %vm813, %v820, %v821
      %v823 = vrot.slane %v557, 1
      %v824 = vrot.slane %v574, 1
      %v825 = vsel %vm813, %v823, %v824
      %v826 = vrot.slane %v558, 1
      %v827 = vrot.slane %v575, 1
      %v828 = vsel %vm813, %v826, %v827
      %v829 = vrot.slane %v559, 1
      %v830 = vrot.slane %v576, 1
      %v831 = vsel %vm813, %v829, %v830
      %v832 = vrot.slane %v560, 1
      %v833 = vrot.slane %v577, 1
      %v834 = vsel %vm813, %v832, %v833
      %v835 = vrot.slane %v561, 1
      %v836 = vrot.slane %v578, 1
      %v837 = vsel %vm813, %v835, %v836
      %v838 = vrot.slane %v562, 1
      %v839 = vrot.slane %v579, 1
      %v840 = vsel %vm813, %v838, %v839
      %v841 = vrot.slane %v563, 1
      %v842 = vrot.slane %v580, 1
      %v843 = vsel %vm813, %v841, %v842
      %v844 = vrot.slane %v564, 1
      %v845 = vrot.slane %v581, 1
      %v846 = vsel %vm813, %v844, %v845
      %v847 = vrot.slane %v565, 1
      %v848 = vrot.slane %v582, 1
      %v849 = vsel %vm813, %v847, %v848
      %v850 = vrot.slane %v566, 1
      %v851 = vrot.slane %v583, 1
      %v852 = vsel %vm813, %v850, %v851
      %v853 = vrot.slane %v567, 1
      %v854 = vrot.slane %v584, 1
      %v855 = vsel %vm813, %v853, %v854
      %v856 = vrot.slane %v568, 1
      %v857 = vrot.slane %v585, 1
      %v858 = vsel %vm813, %v856, %v857
      %v859 = vrot.slane %v569, 1
      %v860 = vrot.slane %v586, 1
      %v861 = vsel %vm813, %v859, %v860
      %v863 = vshrl.u32 %v570, 16
      %v865 = vshll.u32 %v570, 16
      %v867 = vrot.slane %v865, 1
      %v868 = vor.u32 %v863, %v867
      %v870 = vshll.u32 %v587, 16
      %v872 = vrot.slane %v870, 1
      %v873 = vsel %vm588, %v868, %v872
      %v876 = vrot.slane %v570, 1
      %v877 = vrot.slane %v587, 1
      %v878 = vsel %vm813, %v876, %v877
      %879 = vrot.lane.b32.xlu0 %v600, 4
      %v880 = vpop.permute.xlu0 %879
      %881 = vrot.lane.b32.xlu0 %v612, 4
      %v882 = vpop.permute.xlu0 %881
      %883 = vrot.lane.b32.xlu0 %v624, 4
      %v884 = vpop.permute.xlu0 %883
      %885 = vrot.lane.b32.xlu0 %v636, 4
      %v886 = vpop.permute.xlu0 %885
      %887 = vrot.lane.b32.xlu0 %v648, 4
      %v888 = vpop.permute.xlu0 %887
      %889 = vrot.lane.b32.xlu0 %v660, 4
      %v890 = vpop.permute.xlu0 %889
      %891 = vrot.lane.b32.xlu0 %v672, 4
      %v892 = vpop.permute.xlu0 %891
      %893 = vrot.lane.b32.xlu0 %v684, 4
      %v894 = vpop.permute.xlu0 %893
      %895 = vrot.lane.b32.xlu0 %v696, 4
      %v896 = vpop.permute.xlu0 %895
      %897 = vrot.lane.b32.xlu0 %v708, 4
      %v898 = vpop.permute.xlu0 %897
      %899 = vrot.lane.b32.xlu0 %v720, 4
      %v900 = vpop.permute.xlu0 %899
      %901 = vrot.lane.b32.xlu0 %v732, 4
      %v902 = vpop.permute.xlu0 %901
      %903 = vrot.lane.b32.xlu0 %v744, 4
      %v904 = vpop.permute.xlu0 %903
      %905 = vrot.lane.b32.xlu0 %v756, 4
      %v906 = vpop.permute.xlu0 %905
      %907 = vrot.lane.b32.xlu0 %v768, 4
      %v908 = vpop.permute.xlu0 %907
      %909 = vrot.lane.b32.xlu0 %v780, 4
      %v910 = vpop.permute.xlu0 %909
      %911 = vrot.lane.b32.xlu0 %v816, 8
      %v912 = vpop.permute.xlu0 %911
      %913 = vrot.lane.b32.xlu0 %v819, 8
      %v914 = vpop.permute.xlu0 %913
      %915 = vrot.lane.b32.xlu0 %v822, 8
      %v916 = vpop.permute.xlu0 %915
      %917 = vrot.lane.b32.xlu0 %v825, 8
      %v918 = vpop.permute.xlu0 %917
      %919 = vrot.lane.b32.xlu0 %v828, 8
      %v920 = vpop.permute.xlu0 %919
      %921 = vrot.lane.b32.xlu0 %v831, 8
      %v922 = vpop.permute.xlu0 %921
      %923 = vrot.lane.b32.xlu0 %v834, 8
      %v924 = vpop.permute.xlu0 %923
      %925 = vrot.lane.b32.xlu0 %v837, 8
      %v926 = vpop.permute.xlu0 %925
      %927 = vrot.lane.b32.xlu0 %v840, 8
      %v928 = vpop.permute.xlu0 %927
      %929 = vrot.lane.b32.xlu0 %v843, 8
      %v930 = vpop.permute.xlu0 %929
      %931 = vrot.lane.b32.xlu0 %v846, 8
      %v932 = vpop.permute.xlu0 %931
      %933 = vrot.lane.b32.xlu0 %v849, 8
      %v934 = vpop.permute.xlu0 %933
      %935 = vrot.lane.b32.xlu0 %v852, 8
      %v936 = vpop.permute.xlu0 %935
      %937 = vrot.lane.b32.xlu0 %v855, 8
      %v938 = vpop.permute.xlu0 %937
      %939 = vrot.lane.b32.xlu0 %v858, 8
      %v940 = vpop.permute.xlu0 %939
      %941 = vrot.lane.b32.xlu0 %v861, 8
      %v942 = vpop.permute.xlu0 %941
      %943 = vrot.lane.b32.xlu0 %v555, 12
      %v944 = vpop.permute.xlu0 %943
      %945 = vrot.lane.b32.xlu0 %v556, 12
      %v946 = vpop.permute.xlu0 %945
      %947 = vrot.lane.b32.xlu0 %v557, 12
      %v948 = vpop.permute.xlu0 %947
      %949 = vrot.lane.b32.xlu0 %v558, 12
      %v950 = vpop.permute.xlu0 %949
      %951 = vrot.lane.b32.xlu0 %v559, 12
      %v952 = vpop.permute.xlu0 %951
      %953 = vrot.lane.b32.xlu0 %v560, 12
      %v954 = vpop.permute.xlu0 %953
      %955 = vrot.lane.b32.xlu0 %v561, 12
      %v956 = vpop.permute.xlu0 %955
      %957 = vrot.lane.b32.xlu0 %v562, 12
      %v958 = vpop.permute.xlu0 %957
      %959 = vrot.lane.b32.xlu0 %v563, 12
      %v960 = vpop.permute.xlu0 %959
      %961 = vrot.lane.b32.xlu0 %v564, 12
      %v962 = vpop.permute.xlu0 %961
      %963 = vrot.lane.b32.xlu0 %v565, 12
      %v964 = vpop.permute.xlu0 %963
      %965 = vrot.lane.b32.xlu0 %v566, 12
      %v966 = vpop.permute.xlu0 %965
      %967 = vrot.lane.b32.xlu0 %v567, 12
      %v968 = vpop.permute.xlu0 %967
      %969 = vrot.lane.b32.xlu0 %v568, 12
      %v970 = vpop.permute.xlu0 %969
      %971 = vrot.lane.b32.xlu0 %v569, 12
      %v972 = vpop.permute.xlu0 %971
      %973 = vrot.lane.b32.xlu0 %v570, 12
      %v974 = vpop.permute.xlu0 %973
      %975 = vrot.lane.b32.xlu0 %v612, 16
      %v976 = vpop.permute.xlu0 %975
      %977 = vrot.lane.b32.xlu0 %v624, 16
      %v978 = vpop.permute.xlu0 %977
      %979 = vrot.lane.b32.xlu0 %v636, 16
      %v980 = vpop.permute.xlu0 %979
      %981 = vrot.lane.b32.xlu0 %v648, 16
      %v982 = vpop.permute.xlu0 %981
      %983 = vrot.lane.b32.xlu0 %v660, 16
      %v984 = vpop.permute.xlu0 %983
      %985 = vrot.lane.b32.xlu0 %v672, 16
      %v986 = vpop.permute.xlu0 %985
      %987 = vrot.lane.b32.xlu0 %v684, 16
      %v988 = vpop.permute.xlu0 %987
      %989 = vrot.lane.b32.xlu0 %v696, 16
      %v990 = vpop.permute.xlu0 %989
      %991 = vrot.lane.b32.xlu0 %v708, 16
      %v992 = vpop.permute.xlu0 %991
      %993 = vrot.lane.b32.xlu0 %v720, 16
      %v994 = vpop.permute.xlu0 %993
      %995 = vrot.lane.b32.xlu0 %v732, 16
      %v996 = vpop.permute.xlu0 %995
      %997 = vrot.lane.b32.xlu0 %v744, 16
      %v998 = vpop.permute.xlu0 %997
      %999 = vrot.lane.b32.xlu0 %v756, 16
      %v1000 = vpop.permute.xlu0 %999
      %1001 = vrot.lane.b32.xlu0 %v768, 16
      %v1002 = vpop.permute.xlu0 %1001
      %1003 = vrot.lane.b32.xlu0 %v780, 16
      %v1004 = vpop.permute.xlu0 %1003
      %1005 = vrot.lane.b32.xlu0 %v873, 16
      %v1006 = vpop.permute.xlu0 %1005
      %1007 = vrot.lane.b32.xlu0 %v819, 20
      %v1008 = vpop.permute.xlu0 %1007
      %1009 = vrot.lane.b32.xlu0 %v822, 20
      %v1010 = vpop.permute.xlu0 %1009
      %1011 = vrot.lane.b32.xlu0 %v825, 20
      %v1012 = vpop.permute.xlu0 %1011
      %1013 = vrot.lane.b32.xlu0 %v828, 20
      %v1014 = vpop.permute.xlu0 %1013
      %1015 = vrot.lane.b32.xlu0 %v831, 20
      %v1016 = vpop.permute.xlu0 %1015
      %1017 = vrot.lane.b32.xlu0 %v834, 20
      %v1018 = vpop.permute.xlu0 %1017
      %1019 = vrot.lane.b32.xlu0 %v837, 20
      %v1020 = vpop.permute.xlu0 %1019
      %1021 = vrot.lane.b32.xlu0 %v840, 20
      %v1022 = vpop.permute.xlu0 %1021
      %1023 = vrot.lane.b32.xlu0 %v843, 20
      %v1024 = vpop.permute.xlu0 %1023
      %1025 = vrot.lane.b32.xlu0 %v846, 20
      %v1026 = vpop.permute.xlu0 %1025
      %1027 = vrot.lane.b32.xlu0 %v849, 20
      %v1028 = vpop.permute.xlu0 %1027
      %1029 = vrot.lane.b32.xlu0 %v852, 20
      %v1030 = vpop.permute.xlu0 %1029
      %1031 = vrot.lane.b32.xlu0 %v855, 20
      %v1032 = vpop.permute.xlu0 %1031
      %1033 = vrot.lane.b32.xlu0 %v858, 20
      %v1034 = vpop.permute.xlu0 %1033
      %1035 = vrot.lane.b32.xlu0 %v861, 20
      %v1036 = vpop.permute.xlu0 %1035
      %1037 = vrot.lane.b32.xlu0 %v878, 20
      %v1038 = vpop.permute.xlu0 %1037
      %1039 = vrot.lane.b32.xlu0 %v556, 24
      %v1040 = vpop.permute.xlu0 %1039
      %1041 = vrot.lane.b32.xlu0 %v557, 24
      %v1042 = vpop.permute.xlu0 %1041
      %1043 = vrot.lane.b32.xlu0 %v558, 24
      %v1044 = vpop.permute.xlu0 %1043
      %1045 = vrot.lane.b32.xlu0 %v559, 24
      %v1046 = vpop.permute.xlu0 %1045
      %1047 = vrot.lane.b32.xlu0 %v560, 24
      %v1048 = vpop.permute.xlu0 %1047
      %1049 = vrot.lane.b32.xlu0 %v561, 24
      %v1050 = vpop.permute.xlu0 %1049
      %1051 = vrot.lane.b32.xlu0 %v562, 24
      %v1052 = vpop.permute.xlu0 %1051
      %1053 = vrot.lane.b32.xlu0 %v563, 24
      %v1054 = vpop.permute.xlu0 %1053
      %1055 = vrot.lane.b32.xlu0 %v564, 24
      %v1056 = vpop.permute.xlu0 %1055
      %1057 = vrot.lane.b32.xlu0 %v565, 24
      %v1058 = vpop.permute.xlu0 %1057
      %1059 = vrot.lane.b32.xlu0 %v566, 24
      %v1060 = vpop.permute.xlu0 %1059
      %1061 = vrot.lane.b32.xlu0 %v567, 24
      %v1062 = vpop.permute.xlu0 %1061
      %1063 = vrot.lane.b32.xlu0 %v568, 24
      %v1064 = vpop.permute.xlu0 %1063
      %1065 = vrot.lane.b32.xlu0 %v569, 24
      %v1066 = vpop.permute.xlu0 %1065
      %1067 = vrot.lane.b32.xlu0 %v570, 24
      %v1068 = vpop.permute.xlu0 %1067
      %1069 = vrot.lane.b32.xlu0 %v554, 24
      %v1070 = vpop.permute.xlu0 %1069
      %1071 = vrot.lane.b32.xlu0 %v624, 28
      %v1072 = vpop.permute.xlu0 %1071
      %1073 = vrot.lane.b32.xlu0 %v636, 28
      %v1074 = vpop.permute.xlu0 %1073
      %1075 = vrot.lane.b32.xlu0 %v648, 28
      %v1076 = vpop.permute.xlu0 %1075
      %1077 = vrot.lane.b32.xlu0 %v660, 28
      %v1078 = vpop.permute.xlu0 %1077
      %1079 = vrot.lane.b32.xlu0 %v672, 28
      %v1080 = vpop.permute.xlu0 %1079
      %1081 = vrot.lane.b32.xlu0 %v684, 28
      %v1082 = vpop.permute.xlu0 %1081
      %1083 = vrot.lane.b32.xlu0 %v696, 28
      %v1084 = vpop.permute.xlu0 %1083
      %1085 = vrot.lane.b32.xlu0 %v708, 28
      %v1086 = vpop.permute.xlu0 %1085
      %1087 = vrot.lane.b32.xlu0 %v720, 28
      %v1088 = vpop.permute.xlu0 %1087
      %1089 = vrot.lane.b32.xlu0 %v732, 28
      %v1090 = vpop.permute.xlu0 %1089
      %1091 = vrot.lane.b32.xlu0 %v744, 28
      %v1092 = vpop.permute.xlu0 %1091
      %1093 = vrot.lane.b32.xlu0 %v756, 28
      %v1094 = vpop.permute.xlu0 %1093
      %1095 = vrot.lane.b32.xlu0 %v768, 28
      %v1096 = vpop.permute.xlu0 %1095
      %1097 = vrot.lane.b32.xlu0 %v780, 28
      %v1098 = vpop.permute.xlu0 %1097
      %1099 = vrot.lane.b32.xlu0 %v873, 28
      %v1100 = vpop.permute.xlu0 %1099
      %1101 = vrot.lane.b32.xlu0 %v600, 28
      %v1102 = vpop.permute.xlu0 %1101
      %1103 = vrot.lane.b32.xlu0 %v822, 32
      %v1104 = vpop.permute.xlu0 %1103
      %1105 = vrot.lane.b32.xlu0 %v825, 32
      %v1106 = vpop.permute.xlu0 %1105
      %1107 = vrot.lane.b32.xlu0 %v828, 32
      %v1108 = vpop.permute.xlu0 %1107
      %1109 = vrot.lane.b32.xlu0 %v831, 32
      %v1110 = vpop.permute.xlu0 %1109
      %1111 = vrot.lane.b32.xlu0 %v834, 32
      %v1112 = vpop.permute.xlu0 %1111
      %1113 = vrot.lane.b32.xlu0 %v837, 32
      %v1114 = vpop.permute.xlu0 %1113
      %1115 = vrot.lane.b32.xlu0 %v840, 32
      %v1116 = vpop.permute.xlu0 %1115
      %1117 = vrot.lane.b32.xlu0 %v843, 32
      %v1118 = vpop.permute.xlu0 %1117
      %1119 = vrot.lane.b32.xlu0 %v846, 32
      %v1120 = vpop.permute.xlu0 %1119
      %1121 = vrot.lane.b32.xlu0 %v849, 32
      %v1122 = vpop.permute.xlu0 %1121
      %1123 = vrot.lane.b32.xlu0 %v852, 32
      %v1124 = vpop.permute.xlu0 %1123
      %1125 = vrot.lane.b32.xlu0 %v855, 32
      %v1126 = vpop.permute.xlu0 %1125
      %1127 = vrot.lane.b32.xlu0 %v858, 32
      %v1128 = vpop.permute.xlu0 %1127
      %1129 = vrot.lane.b32.xlu0 %v861, 32
      %v1130 = vpop.permute.xlu0 %1129
      %1131 = vrot.lane.b32.xlu0 %v878, 32
      %v1132 = vpop.permute.xlu0 %1131
      %1133 = vrot.lane.b32.xlu0 %v816, 32
      %v1134 = vpop.permute.xlu0 %1133
      %vm1135 = vcmask 31744
      %v1137 = vsel %vm1135, %v554, %v880
      %v1139 = vsel %vm1135, %v555, %v882
      %v1141 = vsel %vm1135, %v556, %v884
      %v1143 = vsel %vm1135, %v557, %v886
      %v1145 = vsel %vm1135, %v558, %v888
      %v1147 = vsel %vm1135, %v559, %v890
      %v1149 = vsel %vm1135, %v560, %v892
      %v1151 = vsel %vm1135, %v561, %v894
      %v1153 = vsel %vm1135, %v562, %v896
      %v1155 = vsel %vm1135, %v563, %v898
      %v1157 = vsel %vm1135, %v564, %v900
      %v1159 = vsel %vm1135, %v565, %v902
      %v1161 = vsel %vm1135, %v566, %v904
      %v1163 = vsel %vm1135, %v567, %v906
      %v1165 = vsel %vm1135, %v568, %v908
      %v1167 = vsel %vm1135, %v569, %v910
      %vm1168 = vcmask 64512
      %v1170 = vsel %vm1168, %v1137, %v912
      %v1172 = vsel %vm1168, %v1139, %v914
      %v1174 = vsel %vm1168, %v1141, %v916
      %v1176 = vsel %vm1168, %v1143, %v918
      %v1178 = vsel %vm1168, %v1145, %v920
      %v1180 = vsel %vm1168, %v1147, %v922
      %v1182 = vsel %vm1168, %v1149, %v924
      %v1184 = vsel %vm1168, %v1151, %v926
      %v1186 = vsel %vm1168, %v1153, %v928
      %v1188 = vsel %vm1168, %v1155, %v930
      %v1190 = vsel %vm1168, %v1157, %v932
      %v1192 = vsel %vm1168, %v1159, %v934
      %v1194 = vsel %vm1168, %v1161, %v936
      %v1196 = vsel %vm1168, %v1163, %v938
      %v1198 = vsel %vm1168, %v1165, %v940
      %v1200 = vsel %vm1168, %v1167, %v942
      %vm1201 = vcmask 97280
      %v1203 = vsel %vm1201, %v1170, %v944
      %v1205 = vsel %vm1201, %v1172, %v946
      %v1207 = vsel %vm1201, %v1174, %v948
      %v1209 = vsel %vm1201, %v1176, %v950
      %v1211 = vsel %vm1201, %v1178, %v952
      %v1213 = vsel %vm1201, %v1180, %v954
      %v1215 = vsel %vm1201, %v1182, %v956
      %v1217 = vsel %vm1201, %v1184, %v958
      %v1219 = vsel %vm1201, %v1186, %v960
      %v1221 = vsel %vm1201, %v1188, %v962
      %v1223 = vsel %vm1201, %v1190, %v964
      %v1225 = vsel %vm1201, %v1192, %v966
      %v1227 = vsel %vm1201, %v1194, %v968
      %v1229 = vsel %vm1201, %v1196, %v970
      %v1231 = vsel %vm1201, %v1198, %v972
      %v1233 = vsel %vm1201, %v1200, %v974
      %vm1234 = vcmask 130048
      %v1236 = vsel %vm1234, %v1203, %v976
      %v1238 = vsel %vm1234, %v1205, %v978
      %v1240 = vsel %vm1234, %v1207, %v980
      %v1242 = vsel %vm1234, %v1209, %v982
      %v1244 = vsel %vm1234, %v1211, %v984
      %v1246 = vsel %vm1234, %v1213, %v986
      %v1248 = vsel %vm1234, %v1215, %v988
      %v1250 = vsel %vm1234, %v1217, %v990
      %v1252 = vsel %vm1234, %v1219, %v992
      %v1254 = vsel %vm1234, %v1221, %v994
      %v1256 = vsel %vm1234, %v1223, %v996
      %v1258 = vsel %vm1234, %v1225, %v998
      %v1260 = vsel %vm1234, %v1227, %v1000
      %v1262 = vsel %vm1234, %v1229, %v1002
      %v1264 = vsel %vm1234, %v1231, %v1004
      %v1266 = vsel %vm1234, %v1233, %v1006
      %vm1267 = vcmask 162816
      %v1269 = vsel %vm1267, %v1236, %v1008
      %v1271 = vsel %vm1267, %v1238, %v1010
      %v1273 = vsel %vm1267, %v1240, %v1012
      %v1275 = vsel %vm1267, %v1242, %v1014
      %v1277 = vsel %vm1267, %v1244, %v1016
      %v1279 = vsel %vm1267, %v1246, %v1018
      %v1281 = vsel %vm1267, %v1248, %v1020
      %v1283 = vsel %vm1267, %v1250, %v1022
      %v1285 = vsel %vm1267, %v1252, %v1024
      %v1287 = vsel %vm1267, %v1254, %v1026
      %v1289 = vsel %vm1267, %v1256, %v1028
      %v1291 = vsel %vm1267, %v1258, %v1030
      %v1293 = vsel %vm1267, %v1260, %v1032
      %v1295 = vsel %vm1267, %v1262, %v1034
      %v1297 = vsel %vm1267, %v1264, %v1036
      %v1299 = vsel %vm1267, %v1266, %v1038
      %vm1300 = vcmask 195584
      %v1302 = vsel %vm1300, %v1269, %v1040
      %v1304 = vsel %vm1300, %v1271, %v1042
      %v1306 = vsel %vm1300, %v1273, %v1044
      %v1308 = vsel %vm1300, %v1275, %v1046
      %v1310 = vsel %vm1300, %v1277, %v1048
      %v1312 = vsel %vm1300, %v1279, %v1050
      %v1314 = vsel %vm1300, %v1281, %v1052
      %v1316 = vsel %vm1300, %v1283, %v1054
      %v1318 = vsel %vm1300, %v1285, %v1056
      %v1320 = vsel %vm1300, %v1287, %v1058
      %v1322 = vsel %vm1300, %v1289, %v1060
      %v1324 = vsel %vm1300, %v1291, %v1062
      %v1326 = vsel %vm1300, %v1293, %v1064
      %v1328 = vsel %vm1300, %v1295, %v1066
      %v1330 = vsel %vm1300, %v1297, %v1068
      %v1332 = vsel %vm1300, %v1299, %v1070
      %vm1333 = vcmask 228352
      %v1335 = vsel %vm1333, %v1302, %v1072
      %v1337 = vsel %vm1333, %v1304, %v1074
      %v1339 = vsel %vm1333, %v1306, %v1076
      %v1341 = vsel %vm1333, %v1308, %v1078
      %v1343 = vsel %vm1333, %v1310, %v1080
      %v1345 = vsel %vm1333, %v1312, %v1082
      %v1347 = vsel %vm1333, %v1314, %v1084
      %v1349 = vsel %vm1333, %v1316, %v1086
      %v1351 = vsel %vm1333, %v1318, %v1088
      %v1353 = vsel %vm1333, %v1320, %v1090
      %v1355 = vsel %vm1333, %v1322, %v1092
      %v1357 = vsel %vm1333, %v1324, %v1094
      %v1359 = vsel %vm1333, %v1326, %v1096
      %v1361 = vsel %vm1333, %v1328, %v1098
      %v1363 = vsel %vm1333, %v1330, %v1100
      %v1365 = vsel %vm1333, %v1332, %v1102
      %vm1366 = vcmask 261120
      %v1368 = vsel %vm1366, %v1335, %v1104
      %v1370 = vsel %vm1366, %v1337, %v1106
      %v1372 = vsel %vm1366, %v1339, %v1108
      %v1374 = vsel %vm1366, %v1341, %v1110
      %v1376 = vsel %vm1366, %v1343, %v1112
      %v1378 = vsel %vm1366, %v1345, %v1114
      %v1380 = vsel %vm1366, %v1347, %v1116
      %v1382 = vsel %vm1366, %v1349, %v1118
      %v1384 = vsel %vm1366, %v1351, %v1120
      %v1386 = vsel %vm1366, %v1353, %v1122
      %v1388 = vsel %vm1366, %v1355, %v1124
      %v1390 = vsel %vm1366, %v1357, %v1126
      %v1392 = vsel %vm1366, %v1359, %v1128
      %v1394 = vsel %vm1366, %v1361, %v1130
      %v1396 = vsel %vm1366, %v1363, %v1132
      %v1398 = vsel %vm1366, %v1365, %v1134
      %v1399 = vld [vmem:[%s264] sm:$0xf]
      %v1400 = vld [vmem:[%s264 + $0x4] sm:$0xf]
      %v1401 = vld [vmem:[%s264 + $0x8] sm:$0xf]
      %v1402 = vld [vmem:[%s264 + $0xc] sm:$0xf]
      %v1403 = vld [vmem:[%s264 + $0x10] sm:$0x3]
      %v1409 = vunpack.c.l.b16 %v1399
      %v1410 = vunpack.c.l.b16 %v1400
      %v1411 = vunpack.c.l.b16 %v1401
      %v1412 = vunpack.c.l.b16 %v1402
      %v1413 = vunpack.c.l.b16 %v1403
      %v1414 = vpack.c.b16 %v1410, %v1409
      %v1415 = vpack.c.b16 %v1412, %v1411
      %v1416 = vpack.c.b16 %v1413, %v1413
      %vm1419 = vcmask 293888
      %v1420 = vsel %vm1419, %v1368, 0
      %v1422 = vsel %vm1419, %v1370, 0
      %v1424 = vsel %vm1419, %v1372, 0
      %v1426 = vsel %vm1419, %v1374, 0
      %v1428 = vsel %vm1419, %v1376, 0
      %v1430 = vsel %vm1419, %v1378, 0
      %v1432 = vsel %vm1419, %v1380, 0
      %v1434 = vsel %vm1419, %v1382, 0
      %v1436 = vsel %vm1419, %v1384, 0
      %v1438 = vsel %vm1419, %v1386, 0
      %v1440 = vsel %vm1419, %v1388, 0
      %v1442 = vsel %vm1419, %v1390, 0
      %v1444 = vsel %vm1419, %v1392, 0
      %v1446 = vsel %vm1419, %v1394, 0
      %v1448 = vsel %vm1419, %v1396, 0
      %v1450 = vsel %vm1419, %v1398, 0
      %vm1452 = vcmask 1041408
      %v1454 = vsel %vm1452, %v1416, 0
      %1456 = vmatprep.subr.bf16.mxu0 0
      %1457 = vmatpush1.bf16.msra.mxu0 %v1414
      %1458 = vmatprep.subr.bf16.mxu0 0
      %1459 = vmatpush1.bf16.msra.mxu0 %v1415
      %1460 = vmatprep.subr.bf16.mxu0 0
      %1461 = vmatpush1.bf16.msra.mxu0 %v1454
      %1462 = vmatprep.subr.bf16.mxu0 0
      %1463 = vmatpush1.bf16.msra.mxu0 0
      %1464 = vmatprep.subr.bf16.mxu0 0
      %1465 = vmatpush1.bf16.msra.mxu0 0
      %1466 = vmatprep.subr.bf16.mxu0 0
      %1467 = vmatpush1.bf16.msra.mxu0 0
      %1468 = vmatprep.subr.bf16.mxu0 0
      %1469 = vmatpush1.bf16.msra.mxu0 0
      %1470 = vmatprep.subr.bf16.mxu0 0
      %1471 = vmatpush1.bf16.msra.mxu0 0
      %1472 = vmatprep.subr.bf16.mxu0 0
      %1473 = vmatpush1.bf16.msra.mxu0 0
      %1474 = vmatprep.subr.bf16.mxu0 0
      %1475 = vmatpush1.bf16.msra.mxu0 0
      %1476 = vmatprep.subr.bf16.mxu0 0
      %1477 = vmatpush1.bf16.msra.mxu0 0
      %1478 = vmatprep.subr.bf16.mxu0 0
      %1479 = vmatpush1.bf16.msra.mxu0 0
      %1480 = vmatprep.subr.bf16.mxu0 0
      %1481 = vmatpush1.bf16.msra.mxu0 0
      %1482 = vmatprep.subr.bf16.mxu0 0
      %1483 = vmatpush1.bf16.msra.mxu0 0
      %1484 = vmatprep.subr.bf16.mxu0 0
      %1485 = vmatpush1.bf16.msra.mxu0 0
      %1486 = vmatprep.subr.bf16.mxu0 0
      %1487 = vmatpush1.bf16.msra.mxu0 0
      %1488 = vmatprep.mubr.bf16.mxu0 0
      %1489 = vmatmul.mubr.bf16.gmra.mrb[0].mxu0 %v1420
      %v1490 = vpop.f32.mrb[0].mxu0
      %v1491 = vadd.f32 0.0, %v1490
      %v1492 = vpop.f32.mrb[0].mxu0
      %v1493 = vpop.f32.mrb[0].mxu0
      %v1494 = vadd.f32 0.0, %v1493
      %v1495 = vpop.f32.mrb[0].mxu0
      %1496 = vmatprep.mubr.bf16.mxu0 0
      %1497 = vmatmul.mubr.bf16.gmra.mrb[0].mxu0 %v1422
      %v1498 = vpop.f32.mrb[0].mxu0
      %v1499 = vadd.f32 0.0, %v1498
      %v1500 = vpop.f32.mrb[0].mxu0
      %v1501 = vpop.f32.mrb[0].mxu0
      %v1502 = vadd.f32 0.0, %v1501
      %v1503 = vpop.f32.mrb[0].mxu0
      %1504 = vmatprep.mubr.bf16.mxu0 0
      %1505 = vmatmul.mubr.bf16.gmra.mrb[0].mxu0 %v1424
      %v1506 = vpop.f32.mrb[0].mxu0
      %v1507 = vadd.f32 0.0, %v1506
      %v1508 = vpop.f32.mrb[0].mxu0
      %v1509 = vpop.f32.mrb[0].mxu0
      %v1510 = vadd.f32 0.0, %v1509
      %v1511 = vpop.f32.mrb[0].mxu0
      %1512 = vmatprep.mubr.bf16.mxu0 0
      %1513 = vmatmul.mubr.bf16.gmra.mrb[0].mxu0 %v1426
      %v1514 = vpop.f32.mrb[0].mxu0
      %v1515 = vadd.f32 0.0, %v1514
      %v1516 = vpop.f32.mrb[0].mxu0
      %v1517 = vpop.f32.mrb[0].mxu0
      %v1518 = vadd.f32 0.0, %v1517
      %v1519 = vpop.f32.mrb[0].mxu0
      %1520 = vmatprep.mubr.bf16.mxu0 0
      %1521 = vmatmul.mubr.bf16.gmra.mrb[0].mxu0 %v1428
      %v1522 = vpop.f32.mrb[0].mxu0
      %v1523 = vadd.f32 0.0, %v1522
      %v1524 = vpop.f32.mrb[0].mxu0
      %v1525 = vpop.f32.mrb[0].mxu0
      %v1526 = vadd.f32 0.0, %v1525
      %v1527 = vpop.f32.mrb[0].mxu0
      %1528 = vmatprep.mubr.bf16.mxu0 0
      %1529 = vmatmul.mubr.bf16.gmra.mrb[0].mxu0 %v1430
      %v1530 = vpop.f32.mrb[0].mxu0
      %v1531 = vadd.f32 0.0, %v1530
      %v1532 = vpop.f32.mrb[0].mxu0
      %v1533 = vpop.f32.mrb[0].mxu0
      %v1534 = vadd.f32 0.0, %v1533
      %v1535 = vpop.f32.mrb[0].mxu0
      %1536 = vmatprep.mubr.bf16.mxu0 0
      %1537 = vmatmul.mubr.bf16.gmra.mrb[0].mxu0 %v1432
      %v1538 = vpop.f32.mrb[0].mxu0
      %v1539 = vadd.f32 0.0, %v1538
      %v1540 = vpop.f32.mrb[0].mxu0
      %v1541 = vpop.f32.mrb[0].mxu0
      %v1542 = vadd.f32 0.0, %v1541
      %v1543 = vpop.f32.mrb[0].mxu0
      %1544 = vmatprep.mubr.bf16.mxu0 0
      %1545 = vmatmul.mubr.bf16.gmra.mrb[0].mxu0 %v1434
      %v1546 = vpop.f32.mrb[0].mxu0
      %v1547 = vadd.f32 0.0, %v1546
      %v1548 = vpop.f32.mrb[0].mxu0
      %v1549 = vpop.f32.mrb[0].mxu0
      %v1550 = vadd.f32 0.0, %v1549
      %v1551 = vpop.f32.mrb[0].mxu0
      %1552 = vmatprep.mubr.bf16.mxu0 0
      %1553 = vmatmul.mubr.bf16.gmra.mrb[0].mxu0 %v1436
      %v1554 = vpop.f32.mrb[0].mxu0
      %v1555 = vadd.f32 0.0, %v1554
      %v1556 = vpop.f32.mrb[0].mxu0
      %v1557 = vpop.f32.mrb[0].mxu0
      %v1558 = vadd.f32 0.0, %v1557
      %v1559 = vpop.f32.mrb[0].mxu0
      %1560 = vmatprep.mubr.bf16.mxu0 0
      %1561 = vmatmul.mubr.bf16.gmra.mrb[0].mxu0 %v1438
      %v1562 = vpop.f32.mrb[0].mxu0
      %v1563 = vadd.f32 0.0, %v1562
      %v1564 = vpop.f32.mrb[0].mxu0
      %v1565 = vpop.f32.mrb[0].mxu0
      %v1566 = vadd.f32 0.0, %v1565
      %v1567 = vpop.f32.mrb[0].mxu0
      %1568 = vmatprep.mubr.bf16.mxu0 0
      %1569 = vmatmul.mubr.bf16.gmra.mrb[0].mxu0 %v1440
      %v1570 = vpop.f32.mrb[0].mxu0
      %v1571 = vadd.f32 0.0, %v1570
      %v1572 = vpop.f32.mrb[0].mxu0
      %v1573 = vpop.f32.mrb[0].mxu0
      %v1574 = vadd.f32 0.0, %v1573
      %v1575 = vpop.f32.mrb[0].mxu0
      %1576 = vmatprep.mubr.bf16.mxu0 0
      %1577 = vmatmul.mubr.bf16.gmra.mrb[0].mxu0 %v1442
      %v1578 = vpop.f32.mrb[0].mxu0
      %v1579 = vadd.f32 0.0, %v1578
      %v1580 = vpop.f32.mrb[0].mxu0
      %v1581 = vpop.f32.mrb[0].mxu0
      %v1582 = vadd.f32 0.0, %v1581
      %v1583 = vpop.f32.mrb[0].mxu0
      %1584 = vmatprep.mubr.bf16.mxu0 0
      %1585 = vmatmul.mubr.bf16.gmra.mrb[0].mxu0 %v1444
      %v1586 = vpop.f32.mrb[0].mxu0
      %v1587 = vadd.f32 0.0, %v1586
      %v1588 = vpop.f32.mrb[0].mxu0
      %v1589 = vpop.f32.mrb[0].mxu0
      %v1590 = vadd.f32 0.0, %v1589
      %v1591 = vpop.f32.mrb[0].mxu0
      %1592 = vmatprep.mubr.bf16.mxu0 0
      %1593 = vmatmul.mubr.bf16.gmra.mrb[0].mxu0 %v1446
      %v1594 = vpop.f32.mrb[0].mxu0
      %v1595 = vadd.f32 0.0, %v1594
      %v1596 = vpop.f32.mrb[0].mxu0
      %v1597 = vpop.f32.mrb[0].mxu0
      %v1598 = vadd.f32 0.0, %v1597
      %v1599 = vpop.f32.mrb[0].mxu0
      %1600 = vmatprep.mubr.bf16.mxu0 0
      %1601 = vmatmul.mubr.bf16.gmra.mrb[0].mxu0 %v1448
      %v1602 = vpop.f32.mrb[0].mxu0
      %v1603 = vadd.f32 0.0, %v1602
      %v1604 = vpop.f32.mrb[0].mxu0
      %v1605 = vpop.f32.mrb[0].mxu0
      %v1606 = vadd.f32 0.0, %v1605
      %v1607 = vpop.f32.mrb[0].mxu0
      %1608 = vmatprep.mubr.bf16.mxu0 0
      %1609 = vmatmul.mubr.bf16.gmra.mrb[0].mxu0 %v1450
      %v1610 = vpop.f32.mrb[0].mxu0
      %v1611 = vadd.f32 0.0, %v1610
      %v1612 = vpop.f32.mrb[0].mxu0
      %v1613 = vpop.f32.mrb[0].mxu0
      %v1614 = vadd.f32 0.0, %v1613
      %v1615 = vpop.f32.mrb[0].mxu0
      %1616 = vdwg.mxu0
      %v1617 = vld [vmem:[%s270] sm:$0x1]
      %v1618 = vld [vmem:[%s276] sm:$0x1]
      %v1620 = vlaneseq
      %v1621 = vshrl.u32 %v1620, 7
      %v1622 = vsub.s32 0, %v1621
      %v1623 = vrot.slane %v1617, %v1622
      %v1625 = vmul.f32 %v1491, %v1623
      %v1626 = vmul.f32 %v1494, %v1623
      %v1627 = vmul.f32 %v1499, %v1623
      %v1628 = vmul.f32 %v1502, %v1623
      %v1629 = vmul.f32 %v1507, %v1623
      %v1630 = vmul.f32 %v1510, %v1623
      %v1631 = vmul.f32 %v1515, %v1623
      %v1632 = vmul.f32 %v1518, %v1623
      %v1633 = vmul.f32 %v1523, %v1623
      %v1634 = vmul.f32 %v1526, %v1623
      %v1635 = vmul.f32 %v1531, %v1623
      %v1636 = vmul.f32 %v1534, %v1623
      %v1637 = vmul.f32 %v1539, %v1623
      %v1638 = vmul.f32 %v1542, %v1623
      %v1639 = vmul.f32 %v1547, %v1623
      %v1640 = vmul.f32 %v1550, %v1623
      %v1641 = vmul.f32 %v1555, %v1623
      %v1642 = vmul.f32 %v1558, %v1623
      %v1643 = vmul.f32 %v1563, %v1623
      %v1644 = vmul.f32 %v1566, %v1623
      %v1645 = vmul.f32 %v1571, %v1623
      %v1646 = vmul.f32 %v1574, %v1623
      %v1647 = vmul.f32 %v1579, %v1623
      %v1648 = vmul.f32 %v1582, %v1623
      %v1649 = vmul.f32 %v1587, %v1623
      %v1650 = vmul.f32 %v1590, %v1623
      %v1651 = vmul.f32 %v1595, %v1623
      %v1652 = vmul.f32 %v1598, %v1623
      %v1653 = vmul.f32 %v1603, %v1623
      %v1654 = vmul.f32 %v1606, %v1623
      %v1655 = vmul.f32 %v1611, %v1623
      %v1656 = vmul.f32 %v1614, %v1623
      %v1658 = vlaneseq
      %v1659 = vshrl.u32 %v1658, 7
      %v1660 = vsub.s32 0, %v1659
      %v1661 = vrot.slane %v1618, %v1660
      %v1663 = vadd.f32 %v1625, %v1661
      %v1664 = vadd.f32 %v1626, %v1661
      %v1665 = vadd.f32 %v1627, %v1661
      %v1666 = vadd.f32 %v1628, %v1661
      %v1667 = vadd.f32 %v1629, %v1661
      %v1668 = vadd.f32 %v1630, %v1661
      %v1669 = vadd.f32 %v1631, %v1661
      %v1670 = vadd.f32 %v1632, %v1661
      %v1671 = vadd.f32 %v1633, %v1661
      %v1672 = vadd.f32 %v1634, %v1661
      %v1673 = vadd.f32 %v1635, %v1661
      %v1674 = vadd.f32 %v1636, %v1661
      %v1675 = vadd.f32 %v1637, %v1661
      %v1676 = vadd.f32 %v1638, %v1661
      %v1677 = vadd.f32 %v1639, %v1661
      %v1678 = vadd.f32 %v1640, %v1661
      %v1679 = vadd.f32 %v1641, %v1661
      %v1680 = vadd.f32 %v1642, %v1661
      %v1681 = vadd.f32 %v1643, %v1661
      %v1682 = vadd.f32 %v1644, %v1661
      %v1683 = vadd.f32 %v1645, %v1661
      %v1684 = vadd.f32 %v1646, %v1661
      %v1685 = vadd.f32 %v1647, %v1661
      %v1686 = vadd.f32 %v1648, %v1661
      %v1687 = vadd.f32 %v1649, %v1661
      %v1688 = vadd.f32 %v1650, %v1661
      %v1689 = vadd.f32 %v1651, %v1661
      %v1690 = vadd.f32 %v1652, %v1661
      %v1691 = vadd.f32 %v1653, %v1661
      %v1692 = vadd.f32 %v1654, %v1661
      %v1693 = vadd.f32 %v1655, %v1661
      %v1694 = vadd.f32 %v1656, %v1661
      %v1695 = vmax.f32 %v1663, 0.0
      %v1696 = vmax.f32 %v1664, 0.0
      %v1697 = vmax.f32 %v1665, 0.0
      %v1698 = vmax.f32 %v1666, 0.0
      %v1699 = vmax.f32 %v1667, 0.0
      %v1700 = vmax.f32 %v1668, 0.0
      %v1701 = vmax.f32 %v1669, 0.0
      %v1702 = vmax.f32 %v1670, 0.0
      %v1703 = vmax.f32 %v1671, 0.0
      %v1704 = vmax.f32 %v1672, 0.0
      %v1705 = vmax.f32 %v1673, 0.0
      %v1706 = vmax.f32 %v1674, 0.0
      %v1707 = vmax.f32 %v1675, 0.0
      %v1708 = vmax.f32 %v1676, 0.0
      %v1709 = vmax.f32 %v1677, 0.0
      %v1710 = vmax.f32 %v1678, 0.0
      %v1711 = vmax.f32 %v1679, 0.0
      %v1712 = vmax.f32 %v1680, 0.0
      %v1713 = vmax.f32 %v1681, 0.0
      %v1714 = vmax.f32 %v1682, 0.0
      %v1715 = vmax.f32 %v1683, 0.0
      %v1716 = vmax.f32 %v1684, 0.0
      %v1717 = vmax.f32 %v1685, 0.0
      %v1718 = vmax.f32 %v1686, 0.0
      %v1719 = vmax.f32 %v1687, 0.0
      %v1720 = vmax.f32 %v1688, 0.0
      %v1721 = vmax.f32 %v1689, 0.0
      %v1722 = vmax.f32 %v1690, 0.0
      %v1723 = vmax.f32 %v1691, 0.0
      %v1724 = vmax.f32 %v1692, 0.0
      %v1725 = vmax.f32 %v1693, 0.0
      %v1726 = vmax.f32 %v1694, 0.0
      %1727 = vst.msk [vmem:[%s284] sm:$0xff] %vm1168, %v1695
      %1728 = vst.msk [vmem:[%s284 + $0x8] sm:$0xff] %vm1168, %v1696
      %1729 = vst.msk [vmem:[%s284 + $0x10] sm:$0xff] %vm1168, %v1697
      %1730 = vst.msk [vmem:[%s284 + $0x18] sm:$0xff] %vm1168, %v1698
      %1731 = vst.msk [vmem:[%s284 + $0x20] sm:$0xff] %vm1168, %v1699
      %1732 = vst.msk [vmem:[%s284 + $0x28] sm:$0xff] %vm1168, %v1700
      %1733 = vst.msk [vmem:[%s284 + $0x30] sm:$0xff] %vm1168, %v1701
      %1734 = vst.msk [vmem:[%s284 + $0x38] sm:$0xff] %vm1168, %v1702
      %1735 = vst.msk [vmem:[%s284 + $0x40] sm:$0xff] %vm1168, %v1703
      %1736 = vst.msk [vmem:[%s284 + $0x48] sm:$0xff] %vm1168, %v1704
      %1737 = vst.msk [vmem:[%s284 + $0x50] sm:$0xff] %vm1168, %v1705
      %1738 = vst.msk [vmem:[%s284 + $0x58] sm:$0xff] %vm1168, %v1706
      %1739 = vst.msk [vmem:[%s284 + $0x60] sm:$0xff] %vm1168, %v1707
      %1740 = vst.msk [vmem:[%s284 + $0x68] sm:$0xff] %vm1168, %v1708
      %1741 = vst.msk [vmem:[%s284 + $0x70] sm:$0xff] %vm1168, %v1709
      %1742 = vst.msk [vmem:[%s284 + $0x78] sm:$0xff] %vm1168, %v1710
      %1743 = vst.msk [vmem:[%s284 + $0x80] sm:$0xff] %vm1168, %v1711
      %1744 = vst.msk [vmem:[%s284 + $0x88] sm:$0xff] %vm1168, %v1712
      %1745 = vst.msk [vmem:[%s284 + $0x90] sm:$0xff] %vm1168, %v1713
      %1746 = vst.msk [vmem:[%s284 + $0x98] sm:$0xff] %vm1168, %v1714
      %1747 = vst.msk [vmem:[%s284 + $0xa0] sm:$0xff] %vm1168, %v1715
      %1748 = vst.msk [vmem:[%s284 + $0xa8] sm:$0xff] %vm1168, %v1716
      %1749 = vst.msk [vmem:[%s284 + $0xb0] sm:$0xff] %vm1168, %v1717
      %1750 = vst.msk [vmem:[%s284 + $0xb8] sm:$0xff] %vm1168, %v1718
      %1751 = vst.msk [vmem:[%s284 + $0xc0] sm:$0xff] %vm1168, %v1719
      %1752 = vst.msk [vmem:[%s284 + $0xc8] sm:$0xff] %vm1168, %v1720
      %1753 = vst.msk [vmem:[%s284 + $0xd0] sm:$0xff] %vm1168, %v1721
      %1754 = vst.msk [vmem:[%s284 + $0xd8] sm:$0xff] %vm1168, %v1722
      %1755 = vst.msk [vmem:[%s284 + $0xe0] sm:$0xff] %vm1168, %v1723
      %1756 = vst.msk [vmem:[%s284 + $0xe8] sm:$0xff] %vm1168, %v1724
      %1757 = vst.msk [vmem:[%s284 + $0xf0] sm:$0xff] %vm1168, %v1725
      %1758 = vst.msk [vmem:[%s284 + $0xf8] sm:$0xff] %vm1168, %v1726
      %p1759 = scmp.lt.s32.totalorder %s19, 1
      %s1760 = scalar_select %p1759, %s19, 1
      %p1761 = scmp.lt.s32.totalorder %s20, 0
      %s1762 = scalar_select %p1761, %s20, 0
      %s1763 = smul.addr %s1760, 32
      %s1764 = sadd.s32 %s1762, %s1763
      %s1765 = smul.addr %s1764, 8
      %s1766 = scalar_lea.vmem %s4, %s1765
      // Predicated region
      $region37: #{tpu_custom_call.1} parent=35 // pred_check
        %p1767 = pneg %p155
      $region38: #{tpu_custom_call.1} parent=35 // pred_check_branch
        %1769 = sbr.rel (%p1767) target = $region40
      $region39: #{tpu_custom_call.1} parent=35 // pred_region
        _
      $region40: #{tpu_custom_call.1} parent=35 // pred_fallthru
        _
    $region36: #{tpu_custom_call.1} parent=5 // pred_fallthru
      _
    %p1770 = scmp.le.s32.totalorder 2, %s10
    // Predicated region
    $region41: #{tpu_custom_call.1} parent=5 // pred_check
      %p1771 = pneg %p1770
    $region42: #{tpu_custom_call.1} parent=5 // pred_check_branch
      %1773 = sbr.rel (%p1771) target = $region44
    $region43: #{tpu_custom_call.1} parent=5 // pred_region
      %s1774 = ssub.s32 %s10, 2
      // Predicated region
      $region45: #{tpu_custom_call.1} parent=43 // pred_check
        %p1775 = pneg %p161
      $region46: #{tpu_custom_call.1} parent=43 // pred_check_branch
        %1777 = sbr.rel (%p1775) target = $region48
      $region47: #{tpu_custom_call.1} parent=43 // pred_region
        %p1778 = scmp.lt.s32.totalorder %s21, 1
        %s1779 = scalar_select %p1778, %s21, 1
        %p1780 = scmp.lt.s32.totalorder %s22, 0
        %s1781 = scalar_select %p1780, %s22, 0
        %s1782 = smul.addr %s1779, 32
        %s1783 = sadd.s32 %s1781, %s1782
        %s1784 = smul.addr %s1783, 8
        %s1785 = scalar_lea.vmem %s4, %s1784
      $region48: #{tpu_custom_call.1} parent=43 // pred_fallthru
        _
    $region44: #{tpu_custom_call.1} parent=5 // pred_fallthru
      _
  $region6: #{tpu_custom_call.1} parent=0 // loop_footer
    %s14 = sadd.s32 1, %s10
  $region7: #{tpu_custom_call.1} parent=0 // loop_footer_branch
    %9 = sbr.rel target = $region3
  $region8: #{tpu_custom_call.1} parent=0 // loop_exit
    _

</llo_original>
